<compile_context>
chip_gen: v5e
topology: v5e:2x2
jax: 0.10.0
libtpu: 0.0.40
codegen_flags: <defaults>
</compile_context>

<pallas_src>
import math
import jax
import jax.numpy as jnp
from jax.experimental import pallas as pl
from jax.experimental.pallas import tpu as pltpu

_NEG_BIG = -1.0e30  # bias for padded vocab columns (masks them out of softmax)


def attn_decoder_kernel(enc_ref, h_ref, w_ih_ref, w_hh_ref, b_ih_ref, b_hh_ref,
                        w_out_ref, b_out_ref,
                        logp_ref, hnew_ref, pattn_ref,
                        hb_scr, m_scr, l_scr):
    j = pl.program_id(0)
    nj = pl.num_programs(0)
    H = h_ref.shape[-1]
    TV = w_out_ref.shape[-1]

    # ---- attention + single GRU step: runs once (tile 0), results kept resident.
    @pl.when(j == 0)
    def _():
        enc = enc_ref[...]                              # (L, H) f32
        h = h_ref[...]                                  # (1, H) f32 == hidden[0]

        # scores = enc @ h^T is (L, 1); softmax over that singleton LAST dim is
        # identically 1 (exact torch parity), so p_attn == 1 and the context is
        # the unweighted sum of encoder_outputs; the 1/sqrt(H) scale is moot.
        pattn_ref[...] = jnp.ones(pattn_ref.shape, pattn_ref.dtype)
        ctx = jnp.sum(enc, axis=0, keepdims=True)       # (1, H)
        x = jnp.maximum(ctx, 0.0)                       # reshape(1,1,H) + ReLU

        # single-step GRU cell (num_layers=1, batch=1), torch gate order [r,z,n];
        # weights pre-transposed to (H, 3H), stored bf16 -> plain (1,H)@(H,3H).
        gi = jnp.dot(x.astype(jnp.bfloat16), w_ih_ref[...],
                     preferred_element_type=jnp.float32) + b_ih_ref[...]
        gh = jnp.dot(h.astype(jnp.bfloat16), w_hh_ref[...],
                     preferred_element_type=jnp.float32) + b_hh_ref[...]
        i_r, i_z, i_n = gi[:, 0:H], gi[:, H:2 * H], gi[:, 2 * H:3 * H]
        h_r, h_z, h_n = gh[:, 0:H], gh[:, H:2 * H], gh[:, 2 * H:3 * H]
        r = jax.nn.sigmoid(i_r + h_r)
        z = jax.nn.sigmoid(i_z + h_z)
        n = jnp.tanh(i_n + r * h_n)
        h_new = (1.0 - z) * n + z * h
        hnew_ref[...] = h_new                           # f32 output (resident)
        hb_scr[...] = h_new.astype(jnp.bfloat16)        # cast once, reuse per tile

        # online log-sum-exp state
        m_scr[...] = jnp.full(m_scr.shape, -jnp.inf, m_scr.dtype)
        l_scr[...] = jnp.zeros(l_scr.shape, l_scr.dtype)

    # ---- streamed output projection: bf16 weight tile, f32 accumulate ----------
    off = pl.multiple_of(j * TV, TV)
    logits_tile = (jnp.dot(hb_scr[...], w_out_ref[...],
                           preferred_element_type=jnp.float32)
                   + b_out_ref[:, pl.ds(off, TV)])      # bias fully resident
    logp_ref[:, pl.ds(off, TV)] = logits_tile           # resident (1, Vp) row

    # ---- online log-sum-exp (overlapped with the next tile's DMA) --------------
    m_old = m_scr[...]
    m_new = jnp.maximum(m_old, jnp.max(logits_tile, axis=-1, keepdims=True))
    l_scr[...] = (l_scr[...] * jnp.exp(m_old - m_new)
                  + jnp.sum(jnp.exp(logits_tile - m_new), axis=-1, keepdims=True))
    m_scr[...] = m_new

    # ---- finalize: single subtract over the fully-written resident row ---------
    @pl.when(j == nj - 1)
    def _():
        lse = m_scr[...] + jnp.log(l_scr[...])          # (1, 1)
        logp_ref[...] = logp_ref[...] - lse


def _round_up(x, m):
    return ((x + m - 1) // m) * m


def _choose_tile_v(V, cap=8192):
    """Vocab tile width: largest multiple of 128 <= cap (but never more than the
    128-rounded vocab).  The vocab is padded up to a multiple of the tile on the
    host, so arbitrary vocab sizes work and the grid always pipelines."""
    cap = max(128, (int(cap) // 128) * 128)
    return min(cap, _round_up(V, 128))


def attn_decoder_forward(params, token_id, hidden, encoder_outputs, *, tile_v=8192):
    """Mirrors AttnDecoderRNN.forward(input, hidden, encoder_outputs)."""
    del token_id
    # TODO(synk): the nn.Embedding lookup + nn.Dropout of the token are dead code
    # in the reference forward (their result never reaches any output); skipped.

    H = hidden.shape[-1]
    L = encoder_outputs.shape[0]
    w_out = params["w_out_t"]                      # (H, V) bf16, pre-transposed
    b_out = params["b_out"]                        # (1, V) f32
    V = w_out.shape[1]

    TV = _choose_tile_v(V, cap=tile_v)
    Vp = _round_up(V, TV)
    if Vp != V:
        # Pad the vocab axis so it tiles cleanly: padded columns get zero weight
        # and a hugely negative bias so they vanish from the log-softmax.
        # (For production, pre-pad the weights once instead of per call.)
        w_out = jnp.pad(w_out, ((0, 0), (0, Vp - V)))
        b_out = jnp.pad(b_out, ((0, 0), (0, Vp - V)), constant_values=_NEG_BIG)
    nj = Vp // TV

    enc = encoder_outputs.astype(jnp.float32)
    h2d = hidden.reshape(1, H).astype(jnp.float32)

    # VMEM: double-buffered w_out tile + single-buffered residents + outputs.
    vmem_bytes = (2 * H * TV * 2                        # w_out tile (bf16, 2 bufs)
                  + L * H * 4 + H * 4                   # enc, hidden
                  + 2 * H * 3 * H * 2 + 2 * 3 * H * 4   # GRU weights (bf16) + biases
                  + 2 * Vp * 4                          # b_out + logp row
                  + (H + L) * 4 + H * 2 + 64)           # hnew, pattn, scratch
    vmem_limit = min(max(int(vmem_bytes * 1.5) + (1 << 20), 32 << 20), 100 << 20)

    cost = pl.CostEstimate(
        flops=2 * H * Vp + 2 * 2 * H * 3 * H + 2 * L * H,
        transcendentals=Vp + 3 * H,
        bytes_accessed=(H * Vp * 2 + 2 * Vp * 4
                        + L * H * 4 + H * 4
                        + 2 * H * 3 * H * 2 + 2 * 3 * H * 4 + (H + L) * 4),
    )

    resident = dict(pipeline_mode=pl.Buffered(1))   # block-invariant inputs:
                                                    # no pointless double-buffering
    logp, h_new, p_attn = pl.pallas_call(
        attn_decoder_kernel,
        out_shape=(
            jax.ShapeDtypeStruct((1, Vp), jnp.float32),   # log_softmax(out(h_new))
            jax.ShapeDtypeStruct((1, H), jnp.float32),    # new GRU hidden
            jax.ShapeDtypeStruct((1, L), jnp.float32),    # p_attn.transpose(-1, 0)
        ),
        grid_spec=pltpu.PrefetchScalarGridSpec(
            num_scalar_prefetch=0,
            grid=(nj,),
            in_specs=[
                pl.BlockSpec((L, H), lambda j: (0, 0), **resident),      # encoder_outputs
                pl.BlockSpec((1, H), lambda j: (0, 0), **resident),      # hidden[0]
                pl.BlockSpec((H, 3 * H), lambda j: (0, 0), **resident),  # GRU w_ih^T bf16
                pl.BlockSpec((H, 3 * H), lambda j: (0, 0), **resident),  # GRU w_hh^T bf16
                pl.BlockSpec((1, 3 * H), lambda j: (0, 0), **resident),  # b_ih
                pl.BlockSpec((1, 3 * H), lambda j: (0, 0), **resident),  # b_hh
                pl.BlockSpec((H, TV), lambda j: (0, j)),                 # w_out^T tile bf16
                pl.BlockSpec((1, Vp), lambda j: (0, 0), **resident),     # b_out (full row)
            ],
            out_specs=(
                pl.BlockSpec((1, Vp), lambda j: (0, 0)),
                pl.BlockSpec((1, H), lambda j: (0, 0)),
                pl.BlockSpec((1, L), lambda j: (0, 0)),
            ),
            scratch_shapes=[
                pltpu.VMEM((1, H), jnp.bfloat16),   # h_new cast once for tile matmuls
                pltpu.VMEM((1, 1), jnp.float32),    # online LSE: running max
                pltpu.VMEM((1, 1), jnp.float32),    # online LSE: running sum
            ],
        ),
        compiler_params=pltpu.CompilerParams(
            # Output row is resident across vocab tiles -> reduction-like axis.
            # TODO(synk): on v7x, split the GRU into its own tiny call and mark the
            # V axis "parallel" with per-tile output blocks so both TensorCores
            # stream half of w_out each (~2x on the HBM-bound phase).
            dimension_semantics=("arbitrary",),
            vmem_limit_bytes=vmem_limit,
        ),
        cost_estimate=cost,
    )(enc, h2d,
      params["w_ih_t"], params["w_hh_t"], params["b_ih"], params["b_hh"],
      w_out, b_out)

    # torch returns (output (1,V), hidden (1,1,H), p_attn.transpose(-1,0) (1,L))
    return logp[:, :V], h_new.reshape(1, 1, H), p_attn


def attn_decoder_reference(params, token_id, hidden, encoder_outputs):
    """Pure-JAX reference with the torch forward's semantics (for validation)."""
    del token_id
    H = hidden.shape[-1]
    enc = encoder_outputs.astype(jnp.float32)
    h = hidden.reshape(1, H).astype(jnp.float32)

    scores = (enc @ h.T) / math.sqrt(H)               # (L, 1)
    p_attn = jax.nn.softmax(scores, axis=-1)          # == 1 (singleton last dim)
    ctx = p_attn.T @ enc                              # (1, H)
    x = jax.nn.relu(ctx)

    gi = jnp.dot(x.astype(jnp.bfloat16), params["w_ih_t"],
                 preferred_element_type=jnp.float32) + params["b_ih"]
    gh = jnp.dot(h.astype(jnp.bfloat16), params["w_hh_t"],
                 preferred_element_type=jnp.float32) + params["b_hh"]
    i_r, i_z, i_n = gi[:, :H], gi[:, H:2 * H], gi[:, 2 * H:]
    h_r, h_z, h_n = gh[:, :H], gh[:, H:2 * H], gh[:, 2 * H:]
    r = jax.nn.sigmoid(i_r + h_r)
    z = jax.nn.sigmoid(i_z + h_z)
    n = jnp.tanh(i_n + r * h_n)
    h_new = (1.0 - z) * n + z * h

    logits = jnp.dot(h_new.astype(jnp.bfloat16), params["w_out_t"],
                     preferred_element_type=jnp.float32) + params["b_out"]
    logp = jax.nn.log_softmax(logits, axis=1)
    return logp, h_new.reshape(1, 1, H), p_attn.T


def init_params(key, hidden_size, output_size, max_length):
    H, V, L = hidden_size, output_size, max_length
    ks = jax.random.split(key, 9)

    def u(k, shape, bound):
        return jax.random.uniform(k, shape, jnp.float32, -bound, bound)

    s = 1.0 / math.sqrt(H)
    return {
        # Present in the torch module but its lookup result is dead in forward.
        "embedding": jax.random.normal(ks[0], (V, H), jnp.float32),
        # GRU weights pre-transposed to (in, 3*hidden), torch gate order [r,z,n],
        # stored bf16 (one-shot prologue HBM traffic halved).
        "w_ih_t": u(ks[1], (3 * H, H), s).T.astype(jnp.bfloat16),
        "w_hh_t": u(ks[2], (3 * H, H), s).T.astype(jnp.bfloat16),
        "b_ih": u(ks[3], (1, 3 * H), s),
        "b_hh": u(ks[4], (1, 3 * H), s),
        # Output projection pre-transposed to (H, V), stored bf16 (HBM-BW dominant).
        # TODO(synk): int8 (v5e/v6e) / fp8 (v7x) w_out would halve the dominant
        # HBM stream again; needs accuracy validation, so not enabled here.
        "w_out_t": u(ks[5], (V, H), s).T.astype(jnp.bfloat16),
        "b_out": u(ks[6], (1, V), s),
        # attn / attn_combine exist in torch __init__ but are unused by forward:
        "w_attn": u(ks[7], (L, 2 * H), 1.0 / math.sqrt(2 * H)),
        "b_attn": u(ks[8], (1, L), 1.0 / math.sqrt(2 * H)),
    }


if __name__ == "__main__":
    # Small, TPU-friendly demo shapes: hidden is a multiple of 128 so GRU gate
    # lane-slices stay aligned; vocab is deliberately NOT a multiple of 128 to
    # exercise the host-side pad + masked log-softmax path.
    H, V, L = 128, 500, 8          # hidden_size, output_size, max_length
    key = jax.random.PRNGKey(0)
    kp, ke, kh = jax.random.split(key, 3)

    params = init_params(kp, H, V, L)
    encoder_outputs = jax.random.normal(ke, (L, H), jnp.float32)
    hidden = jax.random.normal(kh, (1, 1, H), jnp.float32)
    token = jnp.int32(3)

    fwd = jax.jit(attn_decoder_forward, static_argnames=("tile_v",))
    logp, h_new, p_attn = fwd(params, token, hidden, encoder_outputs, tile_v=256)
    jax.block_until_ready((logp, h_new, p_attn))

    # shape / semantics checks
    assert logp.shape == (1, V)
    assert h_new.shape == (1, 1, H)
    assert p_attn.shape == (1, L)
    assert jnp.allclose(jnp.sum(jnp.exp(logp)), 1.0, atol=1e-3)   # valid log-softmax
    assert jnp.allclose(p_attn, 1.0)   # softmax over a singleton dim == 1 (as in torch)

    # numerical check against a pure-JAX reference
    r_logp, r_h, r_p = attn_decoder_reference(params, token, hidden, encoder_outputs)
    assert jnp.allclose(logp, r_logp, atol=2e-2, rtol=2e-2)
    assert jnp.allclose(h_new, r_h, atol=2e-2, rtol=2e-2)
    assert jnp.allclose(p_attn, r_p)

    print("KERNEL_OK")
</pallas_src>

<mosaic_0001>
module attributes {stable_mosaic.version = 11 : i64} {
  func.func @attn_decoder_kernel(%arg0: i32, %arg1: memref<8x128xf32, #tpu.memory_space<vmem>>, %arg2: memref<1x128xf32, #tpu.memory_space<vmem>>, %arg3: memref<128x384xbf16, #tpu.memory_space<vmem>>, %arg4: memref<128x384xbf16, #tpu.memory_space<vmem>>, %arg5: memref<1x384xf32, #tpu.memory_space<vmem>>, %arg6: memref<1x384xf32, #tpu.memory_space<vmem>>, %arg7: memref<128x256xbf16, #tpu.memory_space<vmem>>, %arg8: memref<1x512xf32, #tpu.memory_space<vmem>>, %arg9: memref<1x512xf32, #tpu.memory_space<vmem>>, %arg10: memref<1x128xf32, #tpu.memory_space<vmem>>, %arg11: memref<1x8xf32, #tpu.memory_space<vmem>>, %arg12: memref<1x128xbf16, #tpu.memory_space<vmem>>, %arg13: memref<1x1xf32, #tpu.memory_space<vmem>>, %arg14: memref<1x1xf32, #tpu.memory_space<vmem>>) attributes {dimension_semantics = [#tpu.dimension_semantics<arbitrary>], iteration_bounds = array<i64: 2>, scalar_prefetch = 0 : i64, scratch_operands = 3 : i64, tpu.core_type = #tpu.core_type<tc>, window_params = [{pipeline_mode = #tpu.pipeline_mode<synchronous>, transform_indices = @transform_0, window_bounds = array<i64: 8, 128>}, {pipeline_mode = #tpu.pipeline_mode<synchronous>, transform_indices = @transform_1, window_bounds = array<i64: 1, 128>}, {pipeline_mode = #tpu.pipeline_mode<synchronous>, transform_indices = @transform_2, window_bounds = array<i64: 128, 384>}, {pipeline_mode = #tpu.pipeline_mode<synchronous>, transform_indices = @transform_3, window_bounds = array<i64: 128, 384>}, {pipeline_mode = #tpu.pipeline_mode<synchronous>, transform_indices = @transform_4, window_bounds = array<i64: 1, 384>}, {pipeline_mode = #tpu.pipeline_mode<synchronous>, transform_indices = @transform_5, window_bounds = array<i64: 1, 384>}, {transform_indices = @transform_6, window_bounds = array<i64: 128, 256>}, {pipeline_mode = #tpu.pipeline_mode<synchronous>, transform_indices = @transform_7, window_bounds = array<i64: 1, 512>}, {pipeline_mode = #tpu.pipeline_mode<synchronous>, transform_indices = @transform_8, window_bounds = array<i64: 1, 512>}, {pipeline_mode = #tpu.pipeline_mode<synchronous>, transform_indices = @transform_9, window_bounds = array<i64: 1, 128>}, {pipeline_mode = #tpu.pipeline_mode<synchronous>, transform_indices = @transform_10, window_bounds = array<i64: 1, 8>}]} {
    %c0_i32 = arith.constant 0 : i32
    %0 = arith.cmpi eq, %arg0, %c0_i32 : i32
    %1 = arith.extui %0 : i1 to i32
    %c0_i32_0 = arith.constant 0 : i32
    %2 = arith.cmpi ne, %1, %c0_i32_0 : i32
    scf.if %2 {
      %c0_17 = arith.constant 0 : index
      %c0_18 = arith.constant 0 : index
      %32 = vector.load %arg1[%c0_17, %c0_18] : memref<8x128xf32, #tpu.memory_space<vmem>>, vector<8x128xf32>
      %c0_19 = arith.constant 0 : index
      %c0_20 = arith.constant 0 : index
      %33 = vector.load %arg2[%c0_19, %c0_20] : memref<1x128xf32, #tpu.memory_space<vmem>>, vector<1x128xf32>
      %cst_21 = arith.constant 1.000000e+00 : f32
      %34 = vector.broadcast %cst_21 : f32 to vector<1x8xf32>
      %c0_22 = arith.constant 0 : index
      %c0_23 = arith.constant 0 : index
      %35 = vector.load %arg11[%c0_22, %c0_23] : memref<1x8xf32, #tpu.memory_space<vmem>>, vector<1x8xf32>
      tpu.vector_store %arg11[%c0_22, %c0_23], %34 {strides = array<i32>} : memref<1x8xf32, #tpu.memory_space<vmem>>, vector<1x8xf32>,
      %cst_24 = arith.constant dense<0.000000e+00> : vector<128xf32>
      %36 = vector.multi_reduction <add>, %32, %cst_24 [0] : vector<8x128xf32> to vector<128xf32>
      %37 = vector.shape_cast %36 : vector<128xf32> to vector<1x128xf32>
      %cst_25 = arith.constant 0.000000e+00 : f32
      %38 = vector.broadcast %cst_25 : f32 to vector<1x128xf32>
      %39 = arith.maximumf %37, %38 : vector<1x128xf32>
      %40 = arith.truncf %39 : vector<1x128xf32> to vector<1x128xbf16>
      %c0_26 = arith.constant 0 : index
      %c0_27 = arith.constant 0 : index
      %41 = vector.load %arg3[%c0_26, %c0_27] : memref<128x384xbf16, #tpu.memory_space<vmem>>, vector<128x384xbf16>
      %cst_28 = arith.constant dense<0.000000e+00> : vector<1x384xf32>
      %42 = tpu.matmul %40, %41, %cst_28 {dimension_numbers = #tpu.dot_dimension_numbers<[1], [0], [0], [1], [0, 0, 1, 1], [], []>} : vector<1x128xbf16>, vector<128x384xbf16>, vector<1x384xf32> -> vector<1x384xf32>
      %c0_29 = arith.constant 0 : index
      %c0_30 = arith.constant 0 : index
      %43 = vector.load %arg5[%c0_29, %c0_30] : memref<1x384xf32, #tpu.memory_space<vmem>>, vector<1x384xf32>
      %44 = arith.addf %42, %43 : vector<1x384xf32>
      %45 = arith.truncf %33 : vector<1x128xf32> to vector<1x128xbf16>
      %c0_31 = arith.constant 0 : index
      %c0_32 = arith.constant 0 : index
      %46 = vector.load %arg4[%c0_31, %c0_32] : memref<128x384xbf16, #tpu.memory_space<vmem>>, vector<128x384xbf16>
      %cst_33 = arith.constant dense<0.000000e+00> : vector<1x384xf32>
      %47 = tpu.matmul %45, %46, %cst_33 {dimension_numbers = #tpu.dot_dimension_numbers<[1], [0], [0], [1], [0, 0, 1, 1], [], []>} : vector<1x128xbf16>, vector<128x384xbf16>, vector<1x384xf32> -> vector<1x384xf32>
      %c0_34 = arith.constant 0 : index
      %c0_35 = arith.constant 0 : index
      %48 = vector.load %arg6[%c0_34, %c0_35] : memref<1x384xf32, #tpu.memory_space<vmem>>, vector<1x384xf32>
      %49 = arith.addf %47, %48 : vector<1x384xf32>
      %50 = vector.extract_strided_slice %44 {offsets = [0, 0], sizes = [1, 128], strides = [1, 1]} : vector<1x384xf32> to vector<1x128xf32>
      %51 = vector.extract_strided_slice %44 {offsets = [0, 128], sizes = [1, 128], strides = [1, 1]} : vector<1x384xf32> to vector<1x128xf32>
      %52 = vector.extract_strided_slice %44 {offsets = [0, 256], sizes = [1, 128], strides = [1, 1]} : vector<1x384xf32> to vector<1x128xf32>
      %53 = vector.extract_strided_slice %49 {offsets = [0, 0], sizes = [1, 128], strides = [1, 1]} : vector<1x384xf32> to vector<1x128xf32>
      %54 = vector.extract_strided_slice %49 {offsets = [0, 128], sizes = [1, 128], strides = [1, 1]} : vector<1x384xf32> to vector<1x128xf32>
      %55 = vector.extract_strided_slice %49 {offsets = [0, 256], sizes = [1, 128], strides = [1, 1]} : vector<1x384xf32> to vector<1x128xf32>
      %56 = arith.addf %50, %53 : vector<1x128xf32>
      %57 = arith.negf %56 : vector<1x128xf32>
      %58 = math.exp %57 : vector<1x128xf32>
      %cst_36 = arith.constant 1.000000e+00 : f32
      %59 = vector.broadcast %cst_36 : f32 to vector<1x128xf32>
      %60 = arith.addf %59, %58 : vector<1x128xf32>
      %61 = arith.divf %59, %60 : vector<1x128xf32>
      %62 = arith.addf %51, %54 : vector<1x128xf32>
      %63 = arith.negf %62 : vector<1x128xf32>
      %64 = math.exp %63 : vector<1x128xf32>
      %cst_37 = arith.constant 1.000000e+00 : f32
      %65 = vector.broadcast %cst_37 : f32 to vector<1x128xf32>
      %66 = arith.addf %65, %64 : vector<1x128xf32>
      %67 = arith.divf %65, %66 : vector<1x128xf32>
      %68 = arith.mulf %61, %55 : vector<1x128xf32>
      %69 = arith.addf %52, %68 : vector<1x128xf32>
      %70 = math.tanh %69 : vector<1x128xf32>
      %cst_38 = arith.constant 1.000000e+00 : f32
      %71 = vector.broadcast %cst_38 : f32 to vector<1x128xf32>
      %72 = arith.subf %71, %67 : vector<1x128xf32>
      %73 = arith.mulf %72, %70 : vector<1x128xf32>
      %74 = arith.mulf %67, %33 : vector<1x128xf32>
      %75 = arith.addf %73, %74 : vector<1x128xf32>
      %c0_39 = arith.constant 0 : index
      %c0_40 = arith.constant 0 : index
      %76 = vector.load %arg10[%c0_39, %c0_40] : memref<1x128xf32, #tpu.memory_space<vmem>>, vector<1x128xf32>
      tpu.vector_store %arg10[%c0_39, %c0_40], %75 {strides = array<i32>} : memref<1x128xf32, #tpu.memory_space<vmem>>, vector<1x128xf32>,
      %77 = arith.truncf %75 : vector<1x128xf32> to vector<1x128xbf16>
      %c0_41 = arith.constant 0 : index
      %c0_42 = arith.constant 0 : index
      %78 = vector.load %arg12[%c0_41, %c0_42] : memref<1x128xbf16, #tpu.memory_space<vmem>>, vector<1x128xbf16>
      tpu.vector_store %arg12[%c0_41, %c0_42], %77 {strides = array<i32>} : memref<1x128xbf16, #tpu.memory_space<vmem>>, vector<1x128xbf16>,
      %cst_43 = arith.constant 0xFF800000 : f32
      %79 = vector.broadcast %cst_43 : f32 to vector<1x1xf32>
      %c0_44 = arith.constant 0 : index
      %c0_45 = arith.constant 0 : index
      %80 = vector.load %arg13[%c0_44, %c0_45] : memref<1x1xf32, #tpu.memory_space<vmem>>, vector<1x1xf32>
      tpu.vector_store %arg13[%c0_44, %c0_45], %79 {strides = array<i32>} : memref<1x1xf32, #tpu.memory_space<vmem>>, vector<1x1xf32>,
      %cst_46 = arith.constant 0.000000e+00 : f32
      %81 = vector.broadcast %cst_46 : f32 to vector<1x1xf32>
      %c0_47 = arith.constant 0 : index
      %c0_48 = arith.constant 0 : index
      %82 = vector.load %arg14[%c0_47, %c0_48] : memref<1x1xf32, #tpu.memory_space<vmem>>, vector<1x1xf32>
      tpu.vector_store %arg14[%c0_47, %c0_48], %81 {strides = array<i32>} : memref<1x1xf32, #tpu.memory_space<vmem>>, vector<1x1xf32>,
    } else {
    }
    %c256_i32 = arith.constant 256 : i32
    %3 = arith.muli %arg0, %c256_i32 : i32
    %4 = tpu.assume_multiple %3, 256 : i32
    %c0 = arith.constant 0 : index
    %c0_1 = arith.constant 0 : index
    %5 = vector.load %arg12[%c0, %c0_1] : memref<1x128xbf16, #tpu.memory_space<vmem>>, vector<1x128xbf16>
    %c0_2 = arith.constant 0 : index
    %c0_3 = arith.constant 0 : index
    %6 = vector.load %arg7[%c0_2, %c0_3] : memref<128x256xbf16, #tpu.memory_space<vmem>>, vector<128x256xbf16>
    %cst = arith.constant dense<0.000000e+00> : vector<1x256xf32>
    %7 = tpu.matmul %5, %6, %cst {dimension_numbers = #tpu.dot_dimension_numbers<[1], [0], [0], [1], [0, 0, 1, 1], [], []>} : vector<1x128xbf16>, vector<128x256xbf16>, vector<1x256xf32> -> vector<1x256xf32>
    %c0_4 = arith.constant 0 : index
    %8 = arith.index_cast %4 : i32 to index
    %9 = vector.load %arg8[%c0_4, %8] : memref<1x512xf32, #tpu.memory_space<vmem>>, vector<1x256xf32>
    %10 = arith.addf %7, %9 : vector<1x256xf32>
    %c0_5 = arith.constant 0 : index
    %11 = arith.index_cast %4 : i32 to index
    %12 = vector.load %arg9[%c0_5, %11] : memref<1x512xf32, #tpu.memory_space<vmem>>, vector<1x256xf32>
    tpu.vector_store %arg9[%c0_5, %11], %10 {strides = array<i32>} : memref<1x512xf32, #tpu.memory_space<vmem>>, vector<1x256xf32>,
    %c0_6 = arith.constant 0 : index
    %c0_7 = arith.constant 0 : index
    %13 = vector.load %arg13[%c0_6, %c0_7] : memref<1x1xf32, #tpu.memory_space<vmem>>, vector<1x1xf32>
    %cst_8 = arith.constant dense<0xFF800000> : vector<1xf32>
    %14 = vector.multi_reduction <maximumf>, %10, %cst_8 [1] : vector<1x256xf32> to vector<1xf32>
    %15 = vector.shape_cast %14 : vector<1xf32> to vector<1x1xf32>
    %16 = arith.maximumf %13, %15 : vector<1x1xf32>
    %c0_9 = arith.constant 0 : index
    %c0_10 = arith.constant 0 : index
    %17 = vector.load %arg14[%c0_9, %c0_10] : memref<1x1xf32, #tpu.memory_space<vmem>>, vector<1x1xf32>
    %18 = arith.subf %13, %16 : vector<1x1xf32>
    %19 = math.exp %18 : vector<1x1xf32>
    %20 = arith.mulf %17, %19 : vector<1x1xf32>
    %21 = vector.broadcast %16 : vector<1x1xf32> to vector<1x256xf32>
    %22 = arith.subf %10, %21 : vector<1x256xf32>
    %23 = math.exp %22 : vector<1x256xf32>
    %cst_11 = arith.constant dense<0.000000e+00> : vector<1xf32>
    %24 = vector.multi_reduction <add>, %23, %cst_11 [1] : vector<1x256xf32> to vector<1xf32>
    %25 = vector.shape_cast %24 : vector<1xf32> to vector<1x1xf32>
    %26 = arith.addf %20, %25 : vector<1x1xf32>
    %c0_12 = arith.constant 0 : index
    %c0_13 = arith.constant 0 : index
    %27 = vector.load %arg14[%c0_12, %c0_13] : memref<1x1xf32, #tpu.memory_space<vmem>>, vector<1x1xf32>
    tpu.vector_store %arg14[%c0_12, %c0_13], %26 {strides = array<i32>} : memref<1x1xf32, #tpu.memory_space<vmem>>, vector<1x1xf32>,
    %c0_14 = arith.constant 0 : index
    %c0_15 = arith.constant 0 : index
    %28 = vector.load %arg13[%c0_14, %c0_15] : memref<1x1xf32, #tpu.memory_space<vmem>>, vector<1x1xf32>
    tpu.vector_store %arg13[%c0_14, %c0_15], %16 {strides = array<i32>} : memref<1x1xf32, #tpu.memory_space<vmem>>, vector<1x1xf32>,
    %c1_i32 = arith.constant 1 : i32
    %29 = arith.cmpi eq, %arg0, %c1_i32 : i32
    %30 = arith.extui %29 : i1 to i32
    %c0_i32_16 = arith.constant 0 : i32
    %31 = arith.cmpi ne, %30, %c0_i32_16 : i32
    scf.if %31 {
      %c0_17 = arith.constant 0 : index
      %c0_18 = arith.constant 0 : index
      %32 = vector.load %arg13[%c0_17, %c0_18] : memref<1x1xf32, #tpu.memory_space<vmem>>, vector<1x1xf32>
      %c0_19 = arith.constant 0 : index
      %c0_20 = arith.constant 0 : index
      %33 = vector.load %arg14[%c0_19, %c0_20] : memref<1x1xf32, #tpu.memory_space<vmem>>, vector<1x1xf32>
      %34 = math.log %33 : vector<1x1xf32>
      %35 = arith.addf %32, %34 : vector<1x1xf32>
      %c0_21 = arith.constant 0 : index
      %c0_22 = arith.constant 0 : index
      %36 = vector.load %arg9[%c0_21, %c0_22] : memref<1x512xf32, #tpu.memory_space<vmem>>, vector<1x512xf32>
      %37 = vector.broadcast %35 : vector<1x1xf32> to vector<1x512xf32>
      %38 = arith.subf %36, %37 : vector<1x512xf32>
      %c0_23 = arith.constant 0 : index
      %c0_24 = arith.constant 0 : index
      %39 = vector.load %arg9[%c0_23, %c0_24] : memref<1x512xf32, #tpu.memory_space<vmem>>, vector<1x512xf32>
      tpu.vector_store %arg9[%c0_23, %c0_24], %38 {strides = array<i32>} : memref<1x512xf32, #tpu.memory_space<vmem>>, vector<1x512xf32>,
    } else {
    }
    return
  }
  func.func @transform_0(%arg0: i32) -> (i32, i32) {
    %c0_i32 = arith.constant 0 : i32
    %c0_i32_0 = arith.constant 0 : i32
    %c0_i32_1 = arith.constant 0 : i32
    return %c0_i32, %c0_i32_0 : i32, i32
  }
  func.func @transform_1(%arg0: i32) -> (i32, i32) {
    %c0_i32 = arith.constant 0 : i32
    %c0_i32_0 = arith.constant 0 : i32
    %c0_i32_1 = arith.constant 0 : i32
    return %c0_i32, %c0_i32_0 : i32, i32
  }
  func.func @transform_2(%arg0: i32) -> (i32, i32) {
    %c0_i32 = arith.constant 0 : i32
    %c0_i32_0 = arith.constant 0 : i32
    %c0_i32_1 = arith.constant 0 : i32
    return %c0_i32, %c0_i32_0 : i32, i32
  }
  func.func @transform_3(%arg0: i32) -> (i32, i32) {
    %c0_i32 = arith.constant 0 : i32
    %c0_i32_0 = arith.constant 0 : i32
    %c0_i32_1 = arith.constant 0 : i32
    return %c0_i32, %c0_i32_0 : i32, i32
  }
  func.func @transform_4(%arg0: i32) -> (i32, i32) {
    %c0_i32 = arith.constant 0 : i32
    %c0_i32_0 = arith.constant 0 : i32
    %c0_i32_1 = arith.constant 0 : i32
    return %c0_i32, %c0_i32_0 : i32, i32
  }
  func.func @transform_5(%arg0: i32) -> (i32, i32) {
    %c0_i32 = arith.constant 0 : i32
    %c0_i32_0 = arith.constant 0 : i32
    %c0_i32_1 = arith.constant 0 : i32
    return %c0_i32, %c0_i32_0 : i32, i32
  }
  func.func @transform_6(%arg0: i32) -> (i32, i32) {
    %c0_i32 = arith.constant 0 : i32
    %c0_i32_0 = arith.constant 0 : i32
    return %c0_i32, %arg0 : i32, i32
  }
  func.func @transform_7(%arg0: i32) -> (i32, i32) {
    %c0_i32 = arith.constant 0 : i32
    %c0_i32_0 = arith.constant 0 : i32
    %c0_i32_1 = arith.constant 0 : i32
    return %c0_i32, %c0_i32_0 : i32, i32
  }
  func.func @transform_8(%arg0: i32) -> (i32, i32) {
    %c0_i32 = arith.constant 0 : i32
    %c0_i32_0 = arith.constant 0 : i32
    %c0_i32_1 = arith.constant 0 : i32
    return %c0_i32, %c0_i32_0 : i32, i32
  }
  func.func @transform_9(%arg0: i32) -> (i32, i32) {
    %c0_i32 = arith.constant 0 : i32
    %c0_i32_0 = arith.constant 0 : i32
    %c0_i32_1 = arith.constant 0 : i32
    return %c0_i32, %c0_i32_0 : i32, i32
  }
  func.func @transform_10(%arg0: i32) -> (i32, i32) {
    %c0_i32 = arith.constant 0 : i32
    %c0_i32_0 = arith.constant 0 : i32
    %c0_i32_1 = arith.constant 0 : i32
    return %c0_i32, %c0_i32_0 : i32, i32
  }
}

</mosaic_0001>

<llo_original>
// kernel: attn_decoder_forward.1
$region0: #{attn_decoder_forward.1}
  #allocation0 [shape = 'u32[]', space=smem, size = 0x4, offset = 0x4, fixed_abs, tag = 'smem constant byte address 0x4 - core index']
  #allocation1 [shape = 'u32[72,128]{1,0:T(1,128)}', space=vmem, size = 0x9000, scoped, tag = 'internal scratch']
  #allocation2 [shape = 'bf16[1,128]{1,0:T(2,128)(2,1)}', space=vmem, size = 0x200, scoped, tag = 'scratch operand']
  #allocation3 [shape = 'f32[1,1]{1,0:T(1,128)}', space=vmem, size = 0x200, scoped, tag = 'scratch operand']
  #allocation4 [shape = 'f32[1,1]{1,0:T(1,128)}', space=vmem, size = 0x200, scoped, tag = 'scratch operand']
  %s0 = inlined_call_operand.vmem [shape: f32[8,128], index: 0, kind: input, shape index: {}]
  %s1 = inlined_call_operand.vmem [shape: f32[1,128], index: 1, kind: input, shape index: {}]
  %s2 = inlined_call_operand.vmem [shape: bf16[128,384], index: 2, kind: input, shape index: {}]
  %s3 = inlined_call_operand.vmem [shape: bf16[128,384], index: 3, kind: input, shape index: {}]
  %s4 = inlined_call_operand.vmem [shape: f32[1,384], index: 4, kind: input, shape index: {}]
  %s5 = inlined_call_operand.vmem [shape: f32[1,384], index: 5, kind: input, shape index: {}]
  %s6 = inlined_call_operand.vmem [shape: bf16[128,512], index: 6, kind: input, shape index: {}]
  %s7 = inlined_call_operand.vmem [shape: f32[1,512], index: 7, kind: input, shape index: {}]
  %s8 = inlined_call_operand.hbm [shape: f32[1,512], index: 8, kind: output, shape index: {0}]
  %s9 = inlined_call_operand.hbm [shape: f32[1,128], index: 9, kind: output, shape index: {1}]
  %s10 = inlined_call_operand.hbm [shape: f32[1,8], index: 10, kind: output, shape index: {2}]
  %11 = xla_tuple %s8, %s9, %s10
  %s12 = sld [smem:[#allocation0]]
  $region127: #{attn_decoder_forward.1} parent=0
    _
  %s14 = ssub.s32 1, %s12
  %s15 = scalar_select 0, %s14, %s12
  $region1: #{attn_decoder_forward.1} parent=0
    #allocation5 [shape = 'u8[131072]{0}', space=vmem, size = 0x20000, scoped, tag = 'input window, operand 6']
    #allocation6 [shape = 'u8[2048]{0}', space=vmem, size = 0x800, scoped, tag = 'output window, operand 0, single buffered']
    #allocation7 [shape = 's32[2]{0}', space=sflag, size = 0x8, scoped, tag = 'scoped memory for attn_decoder_forward.1']
    #allocation8 [shape = 'u8[512]{0}', space=vmem, size = 0x400, scoped, tag = 'output window, operand 1, single buffered']
    #allocation9 [shape = 's32[1]{0}', space=sflag, size = 0x4, scoped, tag = 'scoped memory for attn_decoder_forward.1']
    #allocation10 [shape = 'u8[512]{0}', space=vmem, size = 0x400, scoped, tag = 'output window, operand 2, single buffered']
    %16 = vsyncpa [#allocation7], 0
    %17 = vsyncpa [#allocation9], 0
    loop: start=0, step=1, limit=4
    $region2: #{attn_decoder_forward.1} parent=1 // loop_pre_header
      _
    $region3: #{attn_decoder_forward.1} parent=1 // loop_header
      %s19 = sphi 0, %s23
      %p20 = scmp.ge.s32.totalorder %s19, 4
      %s27 = sphi 0, %s27
      %s29 = sphi 0, %s27
      %s30 = sphi 0, %s29
      %s44 = sphi 0, %s30
      %s48 = sphi 0, %s48
      %s50 = sphi 0, %s48
      %s51 = sphi 0, %s50
      %s65 = sphi 0, %s51
      %s69 = sphi 0, %s69
      %s71 = sphi 0, %s69
      %s72 = sphi 0, %s71
      %s86 = sphi 0, %s72
      %s90 = sphi 0, %s90
      %s92 = sphi 0, %s90
      %s93 = sphi 0, %s92
      %s107 = sphi 0, %s93
      %s111 = sphi 0, %s111
      %s113 = sphi 0, %s111
      %s114 = sphi 0, %s113
      %s128 = sphi 0, %s114
      %s132 = sphi 0, %s132
      %s134 = sphi 0, %s132
      %s135 = sphi 0, %s134
      %s149 = sphi 0, %s135
      %s155 = sphi 0, %s157
      %s158 = sphi 0, %s155
      %s159 = sphi 0, %s158
      %s175 = sphi 0, %s159
      %s179 = sphi 0, %s179
      %s181 = sphi 0, %s179
      %s182 = sphi 0, %s181
      %s196 = sphi 0, %s182
      %s200 = sphi 0, %s200
      %s202 = sphi 0, %s200
      %s203 = sphi 0, %s202
      %s217 = sphi 0, %s203
      %s221 = sphi 0, %s221
      %s223 = sphi 0, %s221
      %s224 = sphi 0, %s223
      %s238 = sphi 0, %s224
      %s242 = sphi 0, %s242
      %s244 = sphi 0, %s242
      %s245 = sphi 0, %s244
      %s259 = sphi 0, %s245
    $region4: #{attn_decoder_forward.1} parent=1 // loop_header_branch
      %22 = sbr.rel (%p20) target = $region8
    $region5: #{attn_decoder_forward.1} parent=1 // loop_body
      %s24 = ssub.s32 %s19, 1
      %s25 = ssub.s32 %s19, 2
      %s26 = sadd.s32 %s19, 1
      %s28 = sadd.s32 %s27, 1
      %p31 = scmp.eq.s32.totalorder %s19, 1
      %p32 = scmp.ne.s32.totalorder %s27, %s29
      %p33 = scmp.eq.s32.totalorder %s19, 0
      %p34 = por %p32, %p33
      %p35 = scmp.ne.s32.totalorder %s27, %s29
      %p36 = scmp.eq.s32.totalorder %s24, 1
      %p37 = por %p35, %p36
      %p38 = scmp.ne.s32.totalorder %s29, %s30
      %p39 = scmp.eq.s32.totalorder %s24, 0
      %p40 = por %p38, %p39
      %p41 = scmp.ne.s32.totalorder %s29, %s30
      %p42 = scmp.eq.s32.totalorder %s25, 1
      %p43 = por %p41, %p42
      %p45 = scmp.ne.s32.totalorder %s30, %s44
      %p46 = scmp.eq.s32.totalorder %s25, 0
      %p47 = por %p45, %p46
      %s49 = sadd.s32 %s48, 1
      %p52 = scmp.eq.s32.totalorder %s19, 1
      %p53 = scmp.ne.s32.totalorder %s48, %s50
      %p54 = scmp.eq.s32.totalorder %s19, 0
      %p55 = por %p53, %p54
      %p56 = scmp.ne.s32.totalorder %s48, %s50
      %p57 = scmp.eq.s32.totalorder %s24, 1
      %p58 = por %p56, %p57
      %p59 = scmp.ne.s32.totalorder %s50, %s51
      %p60 = scmp.eq.s32.totalorder %s24, 0
      %p61 = por %p59, %p60
      %p62 = scmp.ne.s32.totalorder %s50, %s51
      %p63 = scmp.eq.s32.totalorder %s25, 1
      %p64 = por %p62, %p63
      %p66 = scmp.ne.s32.totalorder %s51, %s65
      %p67 = scmp.eq.s32.totalorder %s25, 0
      %p68 = por %p66, %p67
      %s70 = sadd.s32 %s69, 1
      %p73 = scmp.eq.s32.totalorder %s19, 1
      %p74 = scmp.ne.s32.totalorder %s69, %s71
      %p75 = scmp.eq.s32.totalorder %s19, 0
      %p76 = por %p74, %p75
      %p77 = scmp.ne.s32.totalorder %s69, %s71
      %p78 = scmp.eq.s32.totalorder %s24, 1
      %p79 = por %p77, %p78
      %p80 = scmp.ne.s32.totalorder %s71, %s72
      %p81 = scmp.eq.s32.totalorder %s24, 0
      %p82 = por %p80, %p81
      %p83 = scmp.ne.s32.totalorder %s71, %s72
      %p84 = scmp.eq.s32.totalorder %s25, 1
      %p85 = por %p83, %p84
      %p87 = scmp.ne.s32.totalorder %s72, %s86
      %p88 = scmp.eq.s32.totalorder %s25, 0
      %p89 = por %p87, %p88
      %s91 = sadd.s32 %s90, 1
      %p94 = scmp.eq.s32.totalorder %s19, 1
      %p95 = scmp.ne.s32.totalorder %s90, %s92
      %p96 = scmp.eq.s32.totalorder %s19, 0
      %p97 = por %p95, %p96
      %p98 = scmp.ne.s32.totalorder %s90, %s92
      %p99 = scmp.eq.s32.totalorder %s24, 1
      %p100 = por %p98, %p99
      %p101 = scmp.ne.s32.totalorder %s92, %s93
      %p102 = scmp.eq.s32.totalorder %s24, 0
      %p103 = por %p101, %p102
      %p104 = scmp.ne.s32.totalorder %s92, %s93
      %p105 = scmp.eq.s32.totalorder %s25, 1
      %p106 = por %p104, %p105
      %p108 = scmp.ne.s32.totalorder %s93, %s107
      %p109 = scmp.eq.s32.totalorder %s25, 0
      %p110 = por %p108, %p109
      %s112 = sadd.s32 %s111, 1
      %p115 = scmp.eq.s32.totalorder %s19, 1
      %p116 = scmp.ne.s32.totalorder %s111, %s113
      %p117 = scmp.eq.s32.totalorder %s19, 0
      %p118 = por %p116, %p117
      %p119 = scmp.ne.s32.totalorder %s111, %s113
      %p120 = scmp.eq.s32.totalorder %s24, 1
      %p121 = por %p119, %p120
      %p122 = scmp.ne.s32.totalorder %s113, %s114
      %p123 = scmp.eq.s32.totalorder %s24, 0
      %p124 = por %p122, %p123
      %p125 = scmp.ne.s32.totalorder %s113, %s114
      %p126 = scmp.eq.s32.totalorder %s25, 1
      %p127 = por %p125, %p126
      %p129 = scmp.ne.s32.totalorder %s114, %s128
      %p130 = scmp.eq.s32.totalorder %s25, 0
      %p131 = por %p129, %p130
      %s133 = sadd.s32 %s132, 1
      %p136 = scmp.eq.s32.totalorder %s19, 1
      %p137 = scmp.ne.s32.totalorder %s132, %s134
      %p138 = scmp.eq.s32.totalorder %s19, 0
      %p139 = por %p137, %p138
      %p140 = scmp.ne.s32.totalorder %s132, %s134
      %p141 = scmp.eq.s32.totalorder %s24, 1
      %p142 = por %p140, %p141
      %p143 = scmp.ne.s32.totalorder %s134, %s135
      %p144 = scmp.eq.s32.totalorder %s24, 0
      %p145 = por %p143, %p144
      %p146 = scmp.ne.s32.totalorder %s134, %s135
      %p147 = scmp.eq.s32.totalorder %s25, 1
      %p148 = por %p146, %p147
      %p150 = scmp.ne.s32.totalorder %s135, %s149
      %p151 = scmp.eq.s32.totalorder %s25, 0
      %p152 = por %p150, %p151
      %s153 = ssub.s32 %s19, %s26
      %p154 = scmp.eq.s32.totalorder %s153, 0
      %s156 = sadd.s32 %s155, 1
      %s157 = scalar_select %p154, %s155, %s156
      %p160 = pneg %p154
      %p161 = scmp.eq.s32.totalorder %s19, 1
      %p162 = por %p160, %p161
      %p163 = scmp.ne.s32.totalorder %s155, %s158
      %p164 = scmp.eq.s32.totalorder %s19, 0
      %p165 = por %p163, %p164
      %p166 = scmp.ne.s32.totalorder %s155, %s158
      %p167 = scmp.eq.s32.totalorder %s24, 1
      %p168 = por %p166, %p167
      %p169 = scmp.ne.s32.totalorder %s158, %s159
      %p170 = scmp.eq.s32.totalorder %s24, 0
      %p171 = por %p169, %p170
      %p172 = scmp.ne.s32.totalorder %s158, %s159
      %p173 = scmp.eq.s32.totalorder %s25, 1
      %p174 = por %p172, %p173
      %p176 = scmp.ne.s32.totalorder %s159, %s175
      %p177 = scmp.eq.s32.totalorder %s25, 0
      %p178 = por %p176, %p177
      %s180 = sadd.s32 %s179, 1
      %p183 = scmp.eq.s32.totalorder %s19, 1
      %p184 = scmp.ne.s32.totalorder %s179, %s181
      %p185 = scmp.eq.s32.totalorder %s19, 0
      %p186 = por %p184, %p185
      %p187 = scmp.ne.s32.totalorder %s179, %s181
      %p188 = scmp.eq.s32.totalorder %s24, 1
      %p189 = por %p187, %p188
      %p190 = scmp.ne.s32.totalorder %s181, %s182
      %p191 = scmp.eq.s32.totalorder %s24, 0
      %p192 = por %p190, %p191
      %p193 = scmp.ne.s32.totalorder %s181, %s182
      %p194 = scmp.eq.s32.totalorder %s25, 1
      %p195 = por %p193, %p194
      %p197 = scmp.ne.s32.totalorder %s182, %s196
      %p198 = scmp.eq.s32.totalorder %s25, 0
      %p199 = por %p197, %p198
      %s201 = sadd.s32 %s200, 1
      %p204 = scmp.eq.s32.totalorder %s19, 1
      %p205 = scmp.ne.s32.totalorder %s200, %s202
      %p206 = scmp.eq.s32.totalorder %s19, 0
      %p207 = por %p205, %p206
      %p208 = scmp.ne.s32.totalorder %s200, %s202
      %p209 = scmp.eq.s32.totalorder %s24, 1
      %p210 = por %p208, %p209
      %p211 = scmp.ne.s32.totalorder %s202, %s203
      %p212 = scmp.eq.s32.totalorder %s24, 0
      %p213 = por %p211, %p212
      %p214 = scmp.ne.s32.totalorder %s202, %s203
      %p215 = scmp.eq.s32.totalorder %s25, 1
      %p216 = por %p214, %p215
      %p218 = scmp.ne.s32.totalorder %s203, %s217
      %p219 = scmp.eq.s32.totalorder %s25, 0
      %p220 = por %p218, %p219
      %s222 = sadd.s32 %s221, 1
      %p225 = scmp.eq.s32.totalorder %s19, 1
      %p226 = scmp.ne.s32.totalorder %s221, %s223
      %p227 = scmp.eq.s32.totalorder %s19, 0
      %p228 = por %p226, %p227
      %p229 = scmp.ne.s32.totalorder %s221, %s223
      %p230 = scmp.eq.s32.totalorder %s24, 1
      %p231 = por %p229, %p230
      %p232 = scmp.ne.s32.totalorder %s223, %s224
      %p233 = scmp.eq.s32.totalorder %s24, 0
      %p234 = por %p232, %p233
      %p235 = scmp.ne.s32.totalorder %s223, %s224
      %p236 = scmp.eq.s32.totalorder %s25, 1
      %p237 = por %p235, %p236
      %p239 = scmp.ne.s32.totalorder %s224, %s238
      %p240 = scmp.eq.s32.totalorder %s25, 0
      %p241 = por %p239, %p240
      %s243 = sadd.s32 %s242, 1
      %p246 = scmp.eq.s32.totalorder %s19, 1
      %p247 = scmp.ne.s32.totalorder %s242, %s244
      %p248 = scmp.eq.s32.totalorder %s19, 0
      %p249 = por %p247, %p248
      %p250 = scmp.ne.s32.totalorder %s242, %s244
      %p251 = scmp.eq.s32.totalorder %s24, 1
      %p252 = por %p250, %p251
      %p253 = scmp.ne.s32.totalorder %s244, %s245
      %p254 = scmp.eq.s32.totalorder %s24, 0
      %p255 = por %p253, %p254
      %p256 = scmp.ne.s32.totalorder %s244, %s245
      %p257 = scmp.eq.s32.totalorder %s25, 1
      %p258 = por %p256, %p257
      %p260 = scmp.ne.s32.totalorder %s245, %s259
      %p261 = scmp.eq.s32.totalorder %s25, 0
      %p262 = por %p260, %p261
      %p263 = scmp.le.s32.totalorder 1, %s19
      %p264 = scmp.lt.s32.totalorder %s19, 3
      %p265 = pnand %p263, %p264
      %p266 = pneg %p265
      // Predicated region
      $region9: #{attn_decoder_forward.1} parent=5 // pred_check
        _
      $region10: #{attn_decoder_forward.1} parent=5 // pred_check_branch
        %268 = sbr.rel (%p265) target = $region12
      $region11: #{attn_decoder_forward.1} parent=5 // pred_region
        %s269 = ssub.s32 %s19, 1
        // Predicated region
        $region13: #{attn_decoder_forward.1} parent=11 // pred_check
          %p270 = pneg %p40
        $region14: #{attn_decoder_forward.1} parent=11 // pred_check_branch
          %272 = sbr.rel (%p270) target = $region16
        $region15: #{attn_decoder_forward.1} parent=11 // pred_region
          _
        $region16: #{attn_decoder_forward.1} parent=11 // pred_fallthru
          _
        // Predicated region
        $region17: #{attn_decoder_forward.1} parent=11 // pred_check
          %p273 = pneg %p61
        $region18: #{attn_decoder_forward.1} parent=11 // pred_check_branch
          %275 = sbr.rel (%p273) target = $region20
        $region19: #{attn_decoder_forward.1} parent=11 // pred_region
          _
        $region20: #{attn_decoder_forward.1} parent=11 // pred_fallthru
          _
        // Predicated region
        $region21: #{attn_decoder_forward.1} parent=11 // pred_check
          %p276 = pneg %p82
        $region22: #{attn_decoder_forward.1} parent=11 // pred_check_branch
          %278 = sbr.rel (%p276) target = $region24
        $region23: #{attn_decoder_forward.1} parent=11 // pred_region
          _
        $region24: #{attn_decoder_forward.1} parent=11 // pred_fallthru
          _
        // Predicated region
        $region25: #{attn_decoder_forward.1} parent=11 // pred_check
          %p279 = pneg %p103
        $region26: #{attn_decoder_forward.1} parent=11 // pred_check_branch
          %281 = sbr.rel (%p279) target = $region28
        $region27: #{attn_decoder_forward.1} parent=11 // pred_region
          _
        $region28: #{attn_decoder_forward.1} parent=11 // pred_fallthru
          _
        // Predicated region
        $region29: #{attn_decoder_forward.1} parent=11 // pred_check
          %p282 = pneg %p124
        $region30: #{attn_decoder_forward.1} parent=11 // pred_check_branch
          %284 = sbr.rel (%p282) target = $region32
        $region31: #{attn_decoder_forward.1} parent=11 // pred_region
          _
        $region32: #{attn_decoder_forward.1} parent=11 // pred_fallthru
          _
        // Predicated region
        $region33: #{attn_decoder_forward.1} parent=11 // pred_check
          %p285 = pneg %p145
        $region34: #{attn_decoder_forward.1} parent=11 // pred_check_branch
          %287 = sbr.rel (%p285) target = $region36
        $region35: #{attn_decoder_forward.1} parent=11 // pred_region
          _
        $region36: #{attn_decoder_forward.1} parent=11 // pred_fallthru
          _
        // Predicated region
        $region37: #{attn_decoder_forward.1} parent=11 // pred_check
          %p288 = pneg %p192
        $region38: #{attn_decoder_forward.1} parent=11 // pred_check_branch
          %290 = sbr.rel (%p288) target = $region40
        $region39: #{attn_decoder_forward.1} parent=11 // pred_region
          _
        $region40: #{attn_decoder_forward.1} parent=11 // pred_fallthru
          _
      $region12: #{attn_decoder_forward.1} parent=5 // pred_fallthru
        _
      %p291 = scmp.lt.s32.totalorder %s19, 2
      // Predicated region
      $region41: #{attn_decoder_forward.1} parent=5 // pred_check
        %p292 = pneg %p291
      $region42: #{attn_decoder_forward.1} parent=5 // pred_check_branch
        %294 = sbr.rel (%p292) target = $region44
      $region43: #{attn_decoder_forward.1} parent=5 // pred_region
        // Predicated region
        $region45: #{attn_decoder_forward.1} parent=43 // pred_check
          %p295 = pneg %p165
        $region46: #{attn_decoder_forward.1} parent=43 // pred_check_branch
          %297 = sbr.rel (%p295) target = $region48
        $region47: #{attn_decoder_forward.1} parent=43 // pred_region
          %s298 = sand.u32 %s155, 1
          %s299 = sand.u32 %s155, 1
          %s300 = smul.addr %s299, 128
          %s301 = scalar_lea.vmem [#allocation5], %s300
          %s302 = smul.u32 2, %s19
          %s303 = smul.addr %s302, 4
          %s304 = scalar_lea.vmem %s6, %s303
          // Predicated region
          $region49: #{attn_decoder_forward.1} parent=47 // pred_check
            _
          $region50: #{attn_decoder_forward.1} parent=47 // pred_check_branch
            %306 = sbr.rel (0) target = $region52
          $region51: #{attn_decoder_forward.1} parent=47 // pred_region
            // Predicated region
            $region53: #{attn_decoder_forward.1} parent=51 // pred_check
              _
            $region54: #{attn_decoder_forward.1} parent=51 // pred_check_branch
              %308 = sbr.rel (0) target = $region56
            $region55: #{attn_decoder_forward.1} parent=51 // pred_region
              // Predicated region
              $region68: #{attn_decoder_forward.1} parent=55 // pred_check
                _
              $region69: #{attn_decoder_forward.1} parent=55 // pred_check_branch
                %354 = sbr.rel (0) target = $region71
              $region70: #{attn_decoder_forward.1} parent=55 // pred_region
                loop: start=0, step=1, limit=1
                $region72: #{attn_decoder_forward.1} parent=70 // loop_pre_header
                  _
                $region73: #{attn_decoder_forward.1} parent=70 // loop_header
                  %s356 = sphi 0, %s360
                  %p357 = scmp.ge.s32.totalorder %s356, 1
                  %s361 = sphi %s304, %s304
                  %s362 = sphi %s301, %s301
                $region74: #{attn_decoder_forward.1} parent=70 // loop_header_branch
                  %359 = sbr.rel (%p357) target = $region78
                $region75: #{attn_decoder_forward.1} parent=70 // loop_body
                  %v363 = vld [vmem:[%s361] sm:$0xff]
                  %364 = vst [vmem:[%s362] sm:$0xff] %v363
                  %v365 = vld [vmem:[%s361 + $0x10] sm:$0xff]
                  %366 = vst [vmem:[%s362 + $0x8] sm:$0xff] %v365
                  %v367 = vld [vmem:[%s361 + $0x20] sm:$0xff]
                  %368 = vst [vmem:[%s362 + $0x10] sm:$0xff] %v367
                  %v369 = vld [vmem:[%s361 + $0x30] sm:$0xff]
                  %370 = vst [vmem:[%s362 + $0x18] sm:$0xff] %v369
                  %v371 = vld [vmem:[%s361 + $0x40] sm:$0xff]
                  %372 = vst [vmem:[%s362 + $0x20] sm:$0xff] %v371
                  %v373 = vld [vmem:[%s361 + $0x50] sm:$0xff]
                  %374 = vst [vmem:[%s362 + $0x28] sm:$0xff] %v373
                  %v375 = vld [vmem:[%s361 + $0x60] sm:$0xff]
                  %376 = vst [vmem:[%s362 + $0x30] sm:$0xff] %v375
                  %v377 = vld [vmem:[%s361 + $0x70] sm:$0xff]
                  %378 = vst [vmem:[%s362 + $0x38] sm:$0xff] %v377
                  %v379 = vld [vmem:[%s361 + $0x80] sm:$0xff]
                  %380 = vst [vmem:[%s362 + $0x40] sm:$0xff] %v379
                  %v381 = vld [vmem:[%s361 + $0x90] sm:$0xff]
                  %382 = vst [vmem:[%s362 + $0x48] sm:$0xff] %v381
                  %v383 = vld [vmem:[%s361 + $0xa0] sm:$0xff]
                  %384 = vst [vmem:[%s362 + $0x50] sm:$0xff] %v383
                  %v385 = vld [vmem:[%s361 + $0xb0] sm:$0xff]
                  %386 = vst [vmem:[%s362 + $0x58] sm:$0xff] %v385
                  %v387 = vld [vmem:[%s361 + $0xc0] sm:$0xff]
                  %388 = vst [vmem:[%s362 + $0x60] sm:$0xff] %v387
                  %v389 = vld [vmem:[%s361 + $0xd0] sm:$0xff]
                  %390 = vst [vmem:[%s362 + $0x68] sm:$0xff] %v389
                  %v391 = vld [vmem:[%s361 + $0xe0] sm:$0xff]
                  %392 = vst [vmem:[%s362 + $0x70] sm:$0xff] %v391
                  %v393 = vld [vmem:[%s361 + $0xf0] sm:$0xff]
                  %394 = vst [vmem:[%s362 + $0x78] sm:$0xff] %v393
                $region76: #{attn_decoder_forward.1} parent=70 // loop_footer
                  %s360 = sadd.s32 1, %s356
                $region77: #{attn_decoder_forward.1} parent=70 // loop_footer_branch
                  %355 = sbr.rel target = $region73
                $region78: #{attn_decoder_forward.1} parent=70 // loop_exit
                  _
              $region71: #{attn_decoder_forward.1} parent=55 // pred_fallthru
                _
              // Predicated region
              $region79: #{attn_decoder_forward.1} parent=55 // pred_check
                _
              $region80: #{attn_decoder_forward.1} parent=55 // pred_check_branch
                %396 = sbr.rel target = $region82
              $region81: #{attn_decoder_forward.1} parent=55 // pred_region
                _
              $region82: #{attn_decoder_forward.1} parent=55 // pred_fallthru
                _
            $region56: #{attn_decoder_forward.1} parent=51 // pred_fallthru
              _
            // Predicated region
            $region57: #{attn_decoder_forward.1} parent=51 // pred_check
              _
            $region58: #{attn_decoder_forward.1} parent=51 // pred_check_branch
              %310 = sbr.rel target = $region60
            $region59: #{attn_decoder_forward.1} parent=51 // pred_region
              %s312 = ssub.s32 256, 1
              loop: start=0, step=1, limit=1
              $region61: #{attn_decoder_forward.1} parent=59 // loop_pre_header
                _
              $region62: #{attn_decoder_forward.1} parent=59 // loop_header
                %s314 = sphi 0, %s318
                %p315 = scmp.ge.s32.totalorder %s314, 1
                %s319 = sphi %s304, %s304
                %s320 = sphi %s301, %s301
              $region63: #{attn_decoder_forward.1} parent=59 // loop_header_branch
                %317 = sbr.rel (%p315) target = $region67
              $region64: #{attn_decoder_forward.1} parent=59 // loop_body
                %v321 = vld [vmem:[%s319] sm:%s312]
                %322 = vst [vmem:[%s320] sm:%s312] %v321
                %v323 = vld [vmem:[%s319 + $0x10] sm:%s312]
                %324 = vst [vmem:[%s320 + $0x8] sm:%s312] %v323
                %v325 = vld [vmem:[%s319 + $0x20] sm:%s312]
                %326 = vst [vmem:[%s320 + $0x10] sm:%s312] %v325
                %v327 = vld [vmem:[%s319 + $0x30] sm:%s312]
                %328 = vst [vmem:[%s320 + $0x18] sm:%s312] %v327
                %v329 = vld [vmem:[%s319 + $0x40] sm:%s312]
                %330 = vst [vmem:[%s320 + $0x20] sm:%s312] %v329
                %v331 = vld [vmem:[%s319 + $0x50] sm:%s312]
                %332 = vst [vmem:[%s320 + $0x28] sm:%s312] %v331
                %v333 = vld [vmem:[%s319 + $0x60] sm:%s312]
                %334 = vst [vmem:[%s320 + $0x30] sm:%s312] %v333
                %v335 = vld [vmem:[%s319 + $0x70] sm:%s312]
                %336 = vst [vmem:[%s320 + $0x38] sm:%s312] %v335
                %v337 = vld [vmem:[%s319 + $0x80] sm:%s312]
                %338 = vst [vmem:[%s320 + $0x40] sm:%s312] %v337
                %v339 = vld [vmem:[%s319 + $0x90] sm:%s312]
                %340 = vst [vmem:[%s320 + $0x48] sm:%s312] %v339
                %v341 = vld [vmem:[%s319 + $0xa0] sm:%s312]
                %342 = vst [vmem:[%s320 + $0x50] sm:%s312] %v341
                %v343 = vld [vmem:[%s319 + $0xb0] sm:%s312]
                %344 = vst [vmem:[%s320 + $0x58] sm:%s312] %v343
                %v345 = vld [vmem:[%s319 + $0xc0] sm:%s312]
                %346 = vst [vmem:[%s320 + $0x60] sm:%s312] %v345
                %v347 = vld [vmem:[%s319 + $0xd0] sm:%s312]
                %348 = vst [vmem:[%s320 + $0x68] sm:%s312] %v347
                %v349 = vld [vmem:[%s319 + $0xe0] sm:%s312]
                %350 = vst [vmem:[%s320 + $0x70] sm:%s312] %v349
                %v351 = vld [vmem:[%s319 + $0xf0] sm:%s312]
                %352 = vst [vmem:[%s320 + $0x78] sm:%s312] %v351
              $region65: #{attn_decoder_forward.1} parent=59 // loop_footer
                %s318 = sadd.s32 1, %s314
              $region66: #{attn_decoder_forward.1} parent=59 // loop_footer_branch
                %313 = sbr.rel target = $region62
              $region67: #{attn_decoder_forward.1} parent=59 // loop_exit
                _
            $region60: #{attn_decoder_forward.1} parent=51 // pred_fallthru
              _
          $region52: #{attn_decoder_forward.1} parent=47 // pred_fallthru
            _
          %397 = vnop
        $region48: #{attn_decoder_forward.1} parent=43 // pred_fallthru
          _
      $region44: #{attn_decoder_forward.1} parent=5 // pred_fallthru
        _
      %p398 = scmp.le.s32.totalorder 1, %s19
      %p399 = scmp.lt.s32.totalorder %s19, 3
      %p400 = pnand %p398, %p399
      %p401 = pneg %p400
      // Predicated region
      $region83: #{attn_decoder_forward.1} parent=5 // pred_check
        _
      $region84: #{attn_decoder_forward.1} parent=5 // pred_check_branch
        %403 = sbr.rel (%p400) target = $region86
      $region85: #{attn_decoder_forward.1} parent=5 // pred_region
        %s404 = ssub.s32 %s19, 1
        %s405 = sand.u32 %s158, 1
        %s406 = sand.u32 %s158, 1
        %s407 = smul.addr %s406, 128
        %s408 = scalar_lea.vmem [#allocation5], %s407
        // Predicated region
        $region87: #{attn_decoder_forward.1} parent=85 // pred_check
          %p409 = pneg %p171
        $region88: #{attn_decoder_forward.1} parent=85 // pred_check_branch
          %411 = sbr.rel (%p409) target = $region90
        $region89: #{attn_decoder_forward.1} parent=85 // pred_region
          _
        $region90: #{attn_decoder_forward.1} parent=85 // pred_fallthru
          _
        %p412 = pneg %p40
        %p413 = pneg %p37
        %p414 = pneg %p61
        %p415 = pneg %p58
        %p416 = pneg %p82
        %p417 = pneg %p79
        %p418 = pneg %p103
        %p419 = pneg %p100
        %p420 = pneg %p124
        %p421 = pneg %p121
        %p422 = pneg %p145
        %p423 = pneg %p142
        %s424 = sand.u32 %s158, 1
        %s425 = sand.u32 %s158, 1
        %s426 = smul.addr %s425, 128
        %s427 = scalar_lea.vmem [#allocation5], %s426
        %p428 = pneg %p171
        %p429 = pneg %p168
        %p430 = pneg %p192
        %p431 = pneg %p189
        %p432 = pneg %p213
        %p433 = pneg %p210
        %p434 = pneg %p234
        %p435 = pneg %p231
        %p436 = pneg %p255
        %p437 = pneg %p252
        %s438 = smul.u32 2, %s24
        %p439 = scmp.eq.s32.totalorder %s24, 0
        // Predicated region
        $region91: #{attn_decoder_forward.1} parent=85 // pred_check
          %p440 = pneg %p439
        $region92: #{attn_decoder_forward.1} parent=85 // pred_check_branch
          %442 = sbr.rel (%p440) target = $region94
        $region93: #{attn_decoder_forward.1} parent=85 // pred_region
          %v443 = vld [vmem:[%s0] sm:$0xff]
          %v444 = vld [vmem:[%s1] sm:$0x1]
          %vm445 = vcmask 57344
          %446 = vst.msk [vmem:[#allocation10] sm:$0x1] %vm445, 1.0
          %v447 = vrot.slane %v443, 4
          %v448 = vadd.f32 %v443, %v447
          %v449 = vrot.slane %v448, 2
          %v450 = vadd.f32 %v448, %v449
          %v451 = vrot.slane %v450, 1
          %v452 = vadd.f32 %v450, %v451
          %v453 = vmax.f32 %v452, 0.0
          %v454 = vpack.c.bf16 %v453, %v453
          %v455 = vld [vmem:[%s2] sm:$0xff]
          %v456 = vld [vmem:[%s2 + $0x8] sm:$0xf]
          %v457 = vld [vmem:[%s2 + $0xc] sm:$0xff]
          %v458 = vld [vmem:[%s2 + $0x14] sm:$0xf]
          %v459 = vld [vmem:[%s2 + $0x18] sm:$0xff]
          %v460 = vld [vmem:[%s2 + $0x20] sm:$0xf]
          %v461 = vld [vmem:[%s2 + $0x24] sm:$0xff]
          %v462 = vld [vmem:[%s2 + $0x2c] sm:$0xf]
          %v463 = vld [vmem:[%s2 + $0x30] sm:$0xff]
          %v464 = vld [vmem:[%s2 + $0x38] sm:$0xf]
          %v465 = vld [vmem:[%s2 + $0x3c] sm:$0xff]
          %v466 = vld [vmem:[%s2 + $0x44] sm:$0xf]
          %v467 = vld [vmem:[%s2 + $0x48] sm:$0xff]
          %v468 = vld [vmem:[%s2 + $0x50] sm:$0xf]
          %v469 = vld [vmem:[%s2 + $0x54] sm:$0xff]
          %v470 = vld [vmem:[%s2 + $0x5c] sm:$0xf]
          %v471 = vld [vmem:[%s2 + $0x60] sm:$0xff]
          %v472 = vld [vmem:[%s2 + $0x68] sm:$0xf]
          %v473 = vld [vmem:[%s2 + $0x6c] sm:$0xff]
          %v474 = vld [vmem:[%s2 + $0x74] sm:$0xf]
          %v475 = vld [vmem:[%s2 + $0x78] sm:$0xff]
          %v476 = vld [vmem:[%s2 + $0x80] sm:$0xf]
          %v477 = vld [vmem:[%s2 + $0x84] sm:$0xff]
          %v478 = vld [vmem:[%s2 + $0x8c] sm:$0xf]
          %v479 = vld [vmem:[%s2 + $0x90] sm:$0xff]
          %v480 = vld [vmem:[%s2 + $0x98] sm:$0xf]
          %v481 = vld [vmem:[%s2 + $0x9c] sm:$0xff]
          %v482 = vld [vmem:[%s2 + $0xa4] sm:$0xf]
          %v483 = vld [vmem:[%s2 + $0xa8] sm:$0xff]
          %v484 = vld [vmem:[%s2 + $0xb0] sm:$0xf]
          %v485 = vld [vmem:[%s2 + $0xb4] sm:$0xff]
          %v486 = vld [vmem:[%s2 + $0xbc] sm:$0xf]
          %v487 = vld [vmem:[%s4] sm:$0x7]
          %v520 = vunpack.c.l.b16 %v455
          %v521 = vunpack.c.h.b16 %v455
          %v522 = vunpack.c.l.b16 %v456
          %v523 = vunpack.c.l.b16 %v457
          %v524 = vunpack.c.h.b16 %v457
          %v525 = vunpack.c.l.b16 %v458
          %v526 = vunpack.c.l.b16 %v459
          %v527 = vunpack.c.h.b16 %v459
          %v528 = vunpack.c.l.b16 %v460
          %v529 = vunpack.c.l.b16 %v461
          %v530 = vunpack.c.h.b16 %v461
          %v531 = vunpack.c.l.b16 %v462
          %v532 = vunpack.c.l.b16 %v463
          %v533 = vunpack.c.h.b16 %v463
          %v534 = vunpack.c.l.b16 %v464
          %v535 = vunpack.c.l.b16 %v465
          %v536 = vunpack.c.h.b16 %v465
          %v537 = vunpack.c.l.b16 %v466
          %v538 = vunpack.c.l.b16 %v467
          %v539 = vunpack.c.h.b16 %v467
          %v540 = vunpack.c.l.b16 %v468
          %v541 = vunpack.c.l.b16 %v469
          %v542 = vunpack.c.h.b16 %v469
          %v543 = vunpack.c.l.b16 %v470
          %v544 = vunpack.c.l.b16 %v471
          %v545 = vunpack.c.h.b16 %v471
          %v546 = vunpack.c.l.b16 %v472
          %v547 = vunpack.c.l.b16 %v473
          %v548 = vunpack.c.h.b16 %v473
          %v549 = vunpack.c.l.b16 %v474
          %v550 = vunpack.c.l.b16 %v475
          %v551 = vunpack.c.h.b16 %v475
          %v552 = vunpack.c.l.b16 %v476
          %v553 = vunpack.c.l.b16 %v477
          %v554 = vunpack.c.h.b16 %v477
          %v555 = vunpack.c.l.b16 %v478
          %v556 = vunpack.c.l.b16 %v479
          %v557 = vunpack.c.h.b16 %v479
          %v558 = vunpack.c.l.b16 %v480
          %v559 = vunpack.c.l.b16 %v481
          %v560 = vunpack.c.h.b16 %v481
          %v561 = vunpack.c.l.b16 %v482
          %v562 = vunpack.c.l.b16 %v483
          %v563 = vunpack.c.h.b16 %v483
          %v564 = vunpack.c.l.b16 %v484
          %v565 = vunpack.c.l.b16 %v485
          %v566 = vunpack.c.h.b16 %v485
          %v567 = vunpack.c.l.b16 %v486
          %v568 = vpack.c.b16 %v523, %v520
          %v569 = vpack.c.b16 %v524, %v521
          %v570 = vpack.c.b16 %v525, %v522
          %v571 = vpack.c.b16 %v529, %v526
          %v572 = vpack.c.b16 %v530, %v527
          %v573 = vpack.c.b16 %v531, %v528
          %v574 = vpack.c.b16 %v535, %v532
          %v575 = vpack.c.b16 %v536, %v533
          %v576 = vpack.c.b16 %v537, %v534
          %v577 = vpack.c.b16 %v541, %v538
          %v578 = vpack.c.b16 %v542, %v539
          %v579 = vpack.c.b16 %v543, %v540
          %v580 = vpack.c.b16 %v547, %v544
          %v581 = vpack.c.b16 %v548, %v545
          %v582 = vpack.c.b16 %v549, %v546
          %v583 = vpack.c.b16 %v553, %v550
          %v584 = vpack.c.b16 %v554, %v551
          %v585 = vpack.c.b16 %v555, %v552
          %v586 = vpack.c.b16 %v559, %v556
          %v587 = vpack.c.b16 %v560, %v557
          %v588 = vpack.c.b16 %v561, %v558
          %v589 = vpack.c.b16 %v565, %v562
          %v590 = vpack.c.b16 %v566, %v563
          %v591 = vpack.c.b16 %v567, %v564
          %v617 = vperm.slane %v487, 0
          %v618 = vperm.slane %v487, 1
          %v619 = vperm.slane %v487, 2
          %623 = vmatpush.bf16.msra.mxu0 %v589
          %624 = vmatpush.bf16.msra.mxu0 %v586
          %625 = vmatpush.bf16.msra.mxu0 %v583
          %626 = vmatpush.bf16.msra.mxu0 %v580
          %627 = vmatpush.bf16.msra.mxu0 %v577
          %628 = vmatpush.bf16.msra.mxu0 %v574
          %629 = vmatpush.bf16.msra.mxu0 %v571
          %630 = vmatpush.bf16.msra.mxu0 %v568
          %631 = vmatmul.bf16.gmra.mxu0 %v454
          %v632 = vpop.f32.mrf.mxu0
          %v633 = vadd.f32 %v617, %v632
          %v634 = vpop.f32.mrf.mxu0
          %635 = vdwg.mxu0
          %636 = vmatpush.bf16.msra.mxu0 %v590
          %637 = vmatpush.bf16.msra.mxu0 %v587
          %638 = vmatpush.bf16.msra.mxu0 %v584
          %639 = vmatpush.bf16.msra.mxu0 %v581
          %640 = vmatpush.bf16.msra.mxu0 %v578
          %641 = vmatpush.bf16.msra.mxu0 %v575
          %642 = vmatpush.bf16.msra.mxu0 %v572
          %643 = vmatpush.bf16.msra.mxu0 %v569
          %644 = vmatmul.bf16.gmra.mxu0 %v454
          %v645 = vpop.f32.mrf.mxu0
          %v646 = vadd.f32 %v618, %v645
          %v647 = vpop.f32.mrf.mxu0
          %648 = vdwg.mxu0
          %649 = vmatpush.bf16.msra.mxu0 %v591
          %650 = vmatpush.bf16.msra.mxu0 %v588
          %651 = vmatpush.bf16.msra.mxu0 %v585
          %652 = vmatpush.bf16.msra.mxu0 %v582
          %653 = vmatpush.bf16.msra.mxu0 %v579
          %654 = vmatpush.bf16.msra.mxu0 %v576
          %655 = vmatpush.bf16.msra.mxu0 %v573
          %656 = vmatpush.bf16.msra.mxu0 %v570
          %657 = vmatmul.bf16.gmra.mxu0 %v454
          %v658 = vpop.f32.mrf.mxu0
          %v659 = vadd.f32 %v619, %v658
          %v660 = vpop.f32.mrf.mxu0
          %661 = vdwg.mxu0
          %v662 = vpack.c.bf16 %v444, %v444
          %v663 = vld [vmem:[%s3] sm:$0xff]
          %v664 = vld [vmem:[%s3 + $0x8] sm:$0xf]
          %v665 = vld [vmem:[%s3 + $0xc] sm:$0xff]
          %v666 = vld [vmem:[%s3 + $0x14] sm:$0xf]
          %v667 = vld [vmem:[%s3 + $0x18] sm:$0xff]
          %v668 = vld [vmem:[%s3 + $0x20] sm:$0xf]
          %v669 = vld [vmem:[%s3 + $0x24] sm:$0xff]
          %v670 = vld [vmem:[%s3 + $0x2c] sm:$0xf]
          %v671 = vld [vmem:[%s3 + $0x30] sm:$0xff]
          %v672 = vld [vmem:[%s3 + $0x38] sm:$0xf]
          %v673 = vld [vmem:[%s3 + $0x3c] sm:$0xff]
          %v674 = vld [vmem:[%s3 + $0x44] sm:$0xf]
          %v675 = vld [vmem:[%s3 + $0x48] sm:$0xff]
          %v676 = vld [vmem:[%s3 + $0x50] sm:$0xf]
          %v677 = vld [vmem:[%s3 + $0x54] sm:$0xff]
          %v678 = vld [vmem:[%s3 + $0x5c] sm:$0xf]
          %v679 = vld [vmem:[%s3 + $0x60] sm:$0xff]
          %v680 = vld [vmem:[%s3 + $0x68] sm:$0xf]
          %v681 = vld [vmem:[%s3 + $0x6c] sm:$0xff]
          %v682 = vld [vmem:[%s3 + $0x74] sm:$0xf]
          %v683 = vld [vmem:[%s3 + $0x78] sm:$0xff]
          %v684 = vld [vmem:[%s3 + $0x80] sm:$0xf]
          %v685 = vld [vmem:[%s3 + $0x84] sm:$0xff]
          %v686 = vld [vmem:[%s3 + $0x8c] sm:$0xf]
          %v687 = vld [vmem:[%s3 + $0x90] sm:$0xff]
          %v688 = vld [vmem:[%s3 + $0x98] sm:$0xf]
          %v689 = vld [vmem:[%s3 + $0x9c] sm:$0xff]
          %v690 = vld [vmem:[%s3 + $0xa4] sm:$0xf]
          %v691 = vld [vmem:[%s3 + $0xa8] sm:$0xff]
          %v692 = vld [vmem:[%s3 + $0xb0] sm:$0xf]
          %v693 = vld [vmem:[%s3 + $0xb4] sm:$0xff]
          %v694 = vld [vmem:[%s3 + $0xbc] sm:$0xf]
          %v695 = vld [vmem:[%s5] sm:$0x7]
          %v728 = vunpack.c.l.b16 %v663
          %v729 = vunpack.c.h.b16 %v663
          %v730 = vunpack.c.l.b16 %v664
          %v731 = vunpack.c.l.b16 %v665
          %v732 = vunpack.c.h.b16 %v665
          %v733 = vunpack.c.l.b16 %v666
          %v734 = vunpack.c.l.b16 %v667
          %v735 = vunpack.c.h.b16 %v667
          %v736 = vunpack.c.l.b16 %v668
          %v737 = vunpack.c.l.b16 %v669
          %v738 = vunpack.c.h.b16 %v669
          %v739 = vunpack.c.l.b16 %v670
          %v740 = vunpack.c.l.b16 %v671
          %v741 = vunpack.c.h.b16 %v671
          %v742 = vunpack.c.l.b16 %v672
          %v743 = vunpack.c.l.b16 %v673
          %v744 = vunpack.c.h.b16 %v673
          %v745 = vunpack.c.l.b16 %v674
          %v746 = vunpack.c.l.b16 %v675
          %v747 = vunpack.c.h.b16 %v675
          %v748 = vunpack.c.l.b16 %v676
          %v749 = vunpack.c.l.b16 %v677
          %v750 = vunpack.c.h.b16 %v677
          %v751 = vunpack.c.l.b16 %v678
          %v752 = vunpack.c.l.b16 %v679
          %v753 = vunpack.c.h.b16 %v679
          %v754 = vunpack.c.l.b16 %v680
          %v755 = vunpack.c.l.b16 %v681
          %v756 = vunpack.c.h.b16 %v681
          %v757 = vunpack.c.l.b16 %v682
          %v758 = vunpack.c.l.b16 %v683
          %v759 = vunpack.c.h.b16 %v683
          %v760 = vunpack.c.l.b16 %v684
          %v761 = vunpack.c.l.b16 %v685
          %v762 = vunpack.c.h.b16 %v685
          %v763 = vunpack.c.l.b16 %v686
          %v764 = vunpack.c.l.b16 %v687
          %v765 = vunpack.c.h.b16 %v687
          %v766 = vunpack.c.l.b16 %v688
          %v767 = vunpack.c.l.b16 %v689
          %v768 = vunpack.c.h.b16 %v689
          %v769 = vunpack.c.l.b16 %v690
          %v770 = vunpack.c.l.b16 %v691
          %v771 = vunpack.c.h.b16 %v691
          %v772 = vunpack.c.l.b16 %v692
          %v773 = vunpack.c.l.b16 %v693
          %v774 = vunpack.c.h.b16 %v693
          %v775 = vunpack.c.l.b16 %v694
          %v776 = vpack.c.b16 %v731, %v728
          %v777 = vpack.c.b16 %v732, %v729
          %v778 = vpack.c.b16 %v733, %v730
          %v779 = vpack.c.b16 %v737, %v734
          %v780 = vpack.c.b16 %v738, %v735
          %v781 = vpack.c.b16 %v739, %v736
          %v782 = vpack.c.b16 %v743, %v740
          %v783 = vpack.c.b16 %v744, %v741
          %v784 = vpack.c.b16 %v745, %v742
          %v785 = vpack.c.b16 %v749, %v746
          %v786 = vpack.c.b16 %v750, %v747
          %v787 = vpack.c.b16 %v751, %v748
          %v788 = vpack.c.b16 %v755, %v752
          %v789 = vpack.c.b16 %v756, %v753
          %v790 = vpack.c.b16 %v757, %v754
          %v791 = vpack.c.b16 %v761, %v758
          %v792 = vpack.c.b16 %v762, %v759
          %v793 = vpack.c.b16 %v763, %v760
          %v794 = vpack.c.b16 %v767, %v764
          %v795 = vpack.c.b16 %v768, %v765
          %v796 = vpack.c.b16 %v769, %v766
          %v797 = vpack.c.b16 %v773, %v770
          %v798 = vpack.c.b16 %v774, %v771
          %v799 = vpack.c.b16 %v775, %v772
          %v825 = vperm.slane %v695, 0
          %v826 = vperm.slane %v695, 1
          %v827 = vperm.slane %v695, 2
          %831 = vmatpush.bf16.msra.mxu0 %v797
          %832 = vmatpush.bf16.msra.mxu0 %v794
          %833 = vmatpush.bf16.msra.mxu0 %v791
          %834 = vmatpush.bf16.msra.mxu0 %v788
          %835 = vmatpush.bf16.msra.mxu0 %v785
          %836 = vmatpush.bf16.msra.mxu0 %v782
          %837 = vmatpush.bf16.msra.mxu0 %v779
          %838 = vmatpush.bf16.msra.mxu0 %v776
          %839 = vmatmul.bf16.gmra.mxu0 %v662
          %v840 = vpop.f32.mrf.mxu0
          %v841 = vadd.f32 %v825, %v840
          %v842 = vpop.f32.mrf.mxu0
          %843 = vdwg.mxu0
          %844 = vmatpush.bf16.msra.mxu0 %v798
          %845 = vmatpush.bf16.msra.mxu0 %v795
          %846 = vmatpush.bf16.msra.mxu0 %v792
          %847 = vmatpush.bf16.msra.mxu0 %v789
          %848 = vmatpush.bf16.msra.mxu0 %v786
          %849 = vmatpush.bf16.msra.mxu0 %v783
          %850 = vmatpush.bf16.msra.mxu0 %v780
          %851 = vmatpush.bf16.msra.mxu0 %v777
          %852 = vmatmul.bf16.gmra.mxu0 %v662
          %v853 = vpop.f32.mrf.mxu0
          %v854 = vadd.f32 %v826, %v853
          %v855 = vpop.f32.mrf.mxu0
          %856 = vdwg.mxu0
          %857 = vmatpush.bf16.msra.mxu0 %v799
          %858 = vmatpush.bf16.msra.mxu0 %v796
          %859 = vmatpush.bf16.msra.mxu0 %v793
          %860 = vmatpush.bf16.msra.mxu0 %v790
          %861 = vmatpush.bf16.msra.mxu0 %v787
          %862 = vmatpush.bf16.msra.mxu0 %v784
          %863 = vmatpush.bf16.msra.mxu0 %v781
          %864 = vmatpush.bf16.msra.mxu0 %v778
          %865 = vmatmul.bf16.gmra.mxu0 %v662
          %v866 = vpop.f32.mrf.mxu0
          %v867 = vadd.f32 %v827, %v866
          %v868 = vpop.f32.mrf.mxu0
          %869 = vdwg.mxu0
          %v870 = vadd.f32 %v633, %v841
          %v871 = vxor.u32 %v870, 2147483648
          %v872 = vmul.f32 %v871, 1.442695
          %v873 = vpow.pop %v872
          %v874 = vadd.f32 %v873, 1.0
          %v875 = vrcp.pop %v874
          %v876 = vmul.f32 %v874, %v875
          %v877 = vsub.f32 1.0, %v876
          %v878 = vmul.f32 %v875, %v877
          %v879 = vadd.f32 %v875, %v878
          %vm880 = vweird.f32 %v874
          %vm881 = vweird.f32 %v875
          %vm882 = vmor %vm880, %vm881
          %v883 = vsel %vm882, %v875, %v879
          %v884 = vand.u32 2147483647, %v874
          %vm885 = vcmp.eq.f32.partialorder %v884, 8.507059e+37
          %v886 = vand.u32 %v874, 2147483648
          %v887 = vor.u32 1.1754944e-38, %v886
          %v888 = vsel %vm885, %v887, %v883
          %v889 = vmul.f32 1.0, %v888
          %v890 = vadd.f32 %v646, %v854
          %v891 = vxor.u32 %v890, 2147483648
          %v892 = vmul.f32 %v891, 1.442695
          %v893 = vpow.pop %v892
          %v894 = vadd.f32 %v893, 1.0
          %v895 = vrcp.pop %v894
          %v896 = vmul.f32 %v894, %v895
          %v897 = vsub.f32 1.0, %v896
          %v898 = vmul.f32 %v895, %v897
          %v899 = vadd.f32 %v895, %v898
          %vm900 = vweird.f32 %v894
          %vm901 = vweird.f32 %v895
          %vm902 = vmor %vm900, %vm901
          %v903 = vsel %vm902, %v895, %v899
          %v904 = vand.u32 2147483647, %v894
          %vm905 = vcmp.eq.f32.partialorder %v904, 8.507059e+37
          %v906 = vand.u32 %v894, 2147483648
          %v907 = vor.u32 1.1754944e-38, %v906
          %v908 = vsel %vm905, %v907, %v903
          %v909 = vmul.f32 1.0, %v908
          %v910 = vmul.f32 %v889, %v867
          %v911 = vadd.f32 %v659, %v910
          %v912 = vtanh.pop %v911
          %v913 = vsub.f32 1.0, %v909
          %v914 = vmul.f32 %v913, %v912
          %v915 = vmul.f32 %v909, %v444
          %v916 = vadd.f32 %v914, %v915
          %917 = vst [vmem:[#allocation8] sm:$0x1] %v916
          %v918 = vpack.c.bf16 %v916, %v916
          %vm919 = vcmask 1040384
          %vm920 = vsmask.f32 256
          %vm921 = vmand %vm919, %vm920
          %v922 = vld [vmem:[#allocation2] sm:$0x1]
          %v923 = vsel %vm921, %v918, %v922
          %924 = vst [vmem:[#allocation2] sm:$0x1] %v923
          %vm925 = vcmask 0
          %926 = vst.msk [vmem:[#allocation3] sm:$0x1] %vm925, -inf
          %927 = vst.msk [vmem:[#allocation4] sm:$0x1] %vm925, 0.0
        $region94: #{attn_decoder_forward.1} parent=85 // pred_fallthru
          _
        %s928 = smul.u32 %s24, 256
        %v929 = vld [vmem:[#allocation2] sm:$0x1]
        %v930 = vld [vmem:[%s408] sm:$0xff]
        %v931 = vld [vmem:[%s408 + $0x8] sm:$0xff]
        %v932 = vld [vmem:[%s408 + $0x10] sm:$0xff]
        %v933 = vld [vmem:[%s408 + $0x18] sm:$0xff]
        %v934 = vld [vmem:[%s408 + $0x20] sm:$0xff]
        %v935 = vld [vmem:[%s408 + $0x28] sm:$0xff]
        %v936 = vld [vmem:[%s408 + $0x30] sm:$0xff]
        %v937 = vld [vmem:[%s408 + $0x38] sm:$0xff]
        %v938 = vld [vmem:[%s408 + $0x40] sm:$0xff]
        %v939 = vld [vmem:[%s408 + $0x48] sm:$0xff]
        %v940 = vld [vmem:[%s408 + $0x50] sm:$0xff]
        %v941 = vld [vmem:[%s408 + $0x58] sm:$0xff]
        %v942 = vld [vmem:[%s408 + $0x60] sm:$0xff]
        %v943 = vld [vmem:[%s408 + $0x68] sm:$0xff]
        %v944 = vld [vmem:[%s408 + $0x70] sm:$0xff]
        %v945 = vld [vmem:[%s408 + $0x78] sm:$0xff]
        %s946 = sshra.s32 %s928, 7
        %s947 = sand.u32 %s928, 127
        %s948 = scalar_lea.vmem %s7, %s946
        %v949 = vld [vmem:[%s948] sm:$0x3]
        %v966 = vunpack.c.l.b16 %v930
        %v967 = vunpack.c.h.b16 %v930
        %v968 = vunpack.c.l.b16 %v931
        %v969 = vunpack.c.h.b16 %v931
        %v970 = vunpack.c.l.b16 %v932
        %v971 = vunpack.c.h.b16 %v932
        %v972 = vunpack.c.l.b16 %v933
        %v973 = vunpack.c.h.b16 %v933
        %v974 = vunpack.c.l.b16 %v934
        %v975 = vunpack.c.h.b16 %v934
        %v976 = vunpack.c.l.b16 %v935
        %v977 = vunpack.c.h.b16 %v935
        %v978 = vunpack.c.l.b16 %v936
        %v979 = vunpack.c.h.b16 %v936
        %v980 = vunpack.c.l.b16 %v937
        %v981 = vunpack.c.h.b16 %v937
        %v982 = vunpack.c.l.b16 %v938
        %v983 = vunpack.c.h.b16 %v938
        %v984 = vunpack.c.l.b16 %v939
        %v985 = vunpack.c.h.b16 %v939
        %v986 = vunpack.c.l.b16 %v940
        %v987 = vunpack.c.h.b16 %v940
        %v988 = vunpack.c.l.b16 %v941
        %v989 = vunpack.c.h.b16 %v941
        %v990 = vunpack.c.l.b16 %v942
        %v991 = vunpack.c.h.b16 %v942
        %v992 = vunpack.c.l.b16 %v943
        %v993 = vunpack.c.h.b16 %v943
        %v994 = vunpack.c.l.b16 %v944
        %v995 = vunpack.c.h.b16 %v944
        %v996 = vunpack.c.l.b16 %v945
        %v997 = vunpack.c.h.b16 %v945
        %v998 = vpack.c.b16 %v968, %v966
        %v999 = vpack.c.b16 %v969, %v967
        %v1000 = vpack.c.b16 %v972, %v970
        %v1001 = vpack.c.b16 %v973, %v971
        %v1002 = vpack.c.b16 %v976, %v974
        %v1003 = vpack.c.b16 %v977, %v975
        %v1004 = vpack.c.b16 %v980, %v978
        %v1005 = vpack.c.b16 %v981, %v979
        %v1006 = vpack.c.b16 %v984, %v982
        %v1007 = vpack.c.b16 %v985, %v983
        %v1008 = vpack.c.b16 %v988, %v986
        %v1009 = vpack.c.b16 %v989, %v987
        %v1010 = vpack.c.b16 %v992, %v990
        %v1011 = vpack.c.b16 %v993, %v991
        %v1012 = vpack.c.b16 %v996, %v994
        %v1013 = vpack.c.b16 %v997, %v995
        %v1031 = vperm.slane %v949, 0
        %v1032 = vperm.slane %v949, 1
        %1035 = vmatpush.bf16.msra.mxu0 %v1012
        %1036 = vmatpush.bf16.msra.mxu0 %v1010
        %1037 = vmatpush.bf16.msra.mxu0 %v1008
        %1038 = vmatpush.bf16.msra.mxu0 %v1006
        %1039 = vmatpush.bf16.msra.mxu0 %v1004
        %1040 = vmatpush.bf16.msra.mxu0 %v1002
        %1041 = vmatpush.bf16.msra.mxu0 %v1000
        %1042 = vmatpush.bf16.msra.mxu0 %v998
        %1043 = vmatmul.bf16.gmra.mxu0 %v929
        %v1044 = vpop.f32.mrf.mxu0
        %v1045 = vadd.f32 %v1031, %v1044
        %v1046 = vpop.f32.mrf.mxu0
        %1047 = vdwg.mxu0
        %1048 = vmatpush.bf16.msra.mxu0 %v1013
        %1049 = vmatpush.bf16.msra.mxu0 %v1011
        %1050 = vmatpush.bf16.msra.mxu0 %v1009
        %1051 = vmatpush.bf16.msra.mxu0 %v1007
        %1052 = vmatpush.bf16.msra.mxu0 %v1005
        %1053 = vmatpush.bf16.msra.mxu0 %v1003
        %1054 = vmatpush.bf16.msra.mxu0 %v1001
        %1055 = vmatpush.bf16.msra.mxu0 %v999
        %1056 = vmatmul.bf16.gmra.mxu0 %v929
        %v1057 = vpop.f32.mrf.mxu0
        %v1058 = vadd.f32 %v1032, %v1057
        %v1059 = vpop.f32.mrf.mxu0
        %1060 = vdwg.mxu0
        %v1063 = vrot.slane %v1058, 7
        %vm1064 = vcmask 1040384
        %v1065 = vsel %vm1064, %v1045, %v1063
        %s1067 = scalar_lea.vmem [#allocation6], %s946
        %v1068 = vlaneseq
        %vm1069 = vcmp.ge.s32.totalorder %v1068, 0
        %vm1070 = vcmp.lt.s32.totalorder %v1068, 256
        %vm1071 = vmand %vm1069, %vm1070
        %1072 = vst.msk [vmem:[%s1067] sm:$0x3] %vm1071, %v1065
        %v1073 = vld [vmem:[#allocation3] sm:$0x1]
        %v1074 = vsel %vm1064, %v1045, -inf
        %v1075 = vsel %vm1064, %v1058, -inf
        %v1076 = vmax.f32 %v1074, %v1075
        %1077 = vmax.xlane.f32.xlu0 %v1076
        %v1078 = vpop.xlane.xlu0 %1077
        %v1079 = vmax.f32 %v1073, %v1078
        %v1080 = vld [vmem:[#allocation4] sm:$0x1]
        %v1081 = vsub.f32 %v1073, %v1079
        %v1082 = vmul.f32 %v1081, 1.442695
        %v1083 = vpow.pop %v1082
        %v1084 = vmul.f32 %v1080, %v1083
        %1086 = vset.pattern.permute.xlu0 0
        %1087 = vperm.xlu0 %1086, %v1079
        %v1088 = vpop.permute.xlu0 %1087
        %v1090 = vperm.slane %v1088, 0
        %v1091 = vsub.f32 %v1045, %v1090
        %v1092 = vsub.f32 %v1058, %v1090
        %v1093 = vmul.f32 %v1091, 1.442695
        %v1094 = vpow.pop %v1093
        %v1095 = vmul.f32 %v1092, 1.442695
        %v1096 = vpow.pop %v1095
        %v1097 = vsel %vm1064, %v1094, 0.0
        %v1098 = vsel %vm1064, %v1096, 0.0
        %v1099 = vadd.f32 %v1097, %v1098
        %1100 = vadd.xlane.f32.xlu0 %v1099
        %v1101 = vpop.xlane.xlu0 %1100
        %v1102 = vadd.f32 %v1084, %v1101
        %vm1103 = vcmask 0
        %1104 = vst.msk [vmem:[#allocation4] sm:$0x1] %vm1103, %v1102
        %1105 = vst.msk [vmem:[#allocation3] sm:$0x1] %vm1103, %v1079
        %p1106 = scmp.eq.s32.totalorder %s24, 1
        // Predicated region
        $region95: #{attn_decoder_forward.1} parent=85 // pred_check
          %p1107 = pneg %p1106
        $region96: #{attn_decoder_forward.1} parent=85 // pred_check_branch
          %1109 = sbr.rel (%p1107) target = $region98
        $region97: #{attn_decoder_forward.1} parent=85 // pred_region
          %v1110 = vld [vmem:[#allocation3] sm:$0x1]
          %v1111 = vld [vmem:[#allocation4] sm:$0x1]
          %v1112 = vlog2.pop %v1111
          %v1113 = vmul.f32 %v1112, 0.6931472
          %v1114 = vadd.f32 %v1110, %v1113
          %v1115 = vld [vmem:[#allocation6] sm:$0xf]
          %1117 = vset.pattern.permute.xlu0 0
          %1118 = vperm.xlu0 %1117, %v1114
          %v1119 = vpop.permute.xlu0 %1118
          %v1121 = vperm.slane %v1119, 0
          %v1122 = vsub.f32 %v1115, %v1121
          %vm1123 = vcmp.lt.s32.totalorder %v1068, 512
          %vm1124 = vmand %vm1069, %vm1123
          %1125 = vst.msk [vmem:[#allocation6] sm:$0xf] %vm1124, %v1122
        $region98: #{attn_decoder_forward.1} parent=85 // pred_fallthru
          _
        // Predicated region
        $region99: #{attn_decoder_forward.1} parent=85 // pred_check
          %p1126 = pneg %p210
        $region100: #{attn_decoder_forward.1} parent=85 // pred_check_branch
          %1128 = sbr.rel (%p1126) target = $region102
        $region101: #{attn_decoder_forward.1} parent=85 // pred_region
          %1130 = vsyncadd [#allocation7], 0
          %s1132 = sshll.u32 [#allocation6], 4
          %s1133 = int_to_ptr.vmem [resolvable:$true] %s1132
          %s1134 = sshll.u32 %s8, 4
          %s1135 = int_to_ptr.hbm [resolvable:$true] %s1134
          %1137 = dma.vmem_to_hbm [thread:$0]  %s1133, 64, %s1135, [#allocation7]
        $region102: #{attn_decoder_forward.1} parent=85 // pred_fallthru
          _
        // Predicated region
        $region103: #{attn_decoder_forward.1} parent=85 // pred_check
          %p1138 = pneg %p231
        $region104: #{attn_decoder_forward.1} parent=85 // pred_check_branch
          %1140 = sbr.rel (%p1138) target = $region106
        $region105: #{attn_decoder_forward.1} parent=85 // pred_region
          %1142 = vsyncadd [#allocation9], 0
          %s1144 = sshll.u32 [#allocation8], 4
          %s1145 = int_to_ptr.vmem [resolvable:$true] %s1144
          %s1146 = sshll.u32 %s9, 4
          %s1147 = int_to_ptr.hbm [resolvable:$true] %s1146
          %1149 = dma.vmem_to_hbm [thread:$0]  %s1145, 16, %s1147, [#allocation9]
        $region106: #{attn_decoder_forward.1} parent=85 // pred_fallthru
          _
        // Predicated region
        $region107: #{attn_decoder_forward.1} parent=85 // pred_check
          %p1150 = pneg %p252
        $region108: #{attn_decoder_forward.1} parent=85 // pred_check_branch
          %1152 = sbr.rel (%p1150) target = $region110
        $region109: #{attn_decoder_forward.1} parent=85 // pred_region
          %1154 = vsyncadd [#allocation9], 0
          %s1156 = sshll.u32 [#allocation10], 4
          %s1157 = int_to_ptr.vmem [resolvable:$true] %s1156
          %s1158 = sshll.u32 %s10, 4
          %s1159 = int_to_ptr.hbm [resolvable:$true] %s1158
          %1161 = dma.vmem_to_hbm [thread:$0]  %s1157, 16, %s1159, [#allocation9]
        $region110: #{attn_decoder_forward.1} parent=85 // pred_fallthru
          _
        // Predicated region
        $region111: #{attn_decoder_forward.1} parent=85 // pred_check
          %p1162 = pneg %p210
        $region112: #{attn_decoder_forward.1} parent=85 // pred_check_branch
          %1164 = sbr.rel (%p1162) target = $region114
        $region113: #{attn_decoder_forward.1} parent=85 // pred_region
          %1166 = dma.done [#allocation7], 64
        $region114: #{attn_decoder_forward.1} parent=85 // pred_fallthru
          _
        // Predicated region
        $region115: #{attn_decoder_forward.1} parent=85 // pred_check
          %p1167 = pneg %p231
        $region116: #{attn_decoder_forward.1} parent=85 // pred_check_branch
          %1169 = sbr.rel (%p1167) target = $region118
        $region117: #{attn_decoder_forward.1} parent=85 // pred_region
          %1171 = dma.done [#allocation9], 16
        $region118: #{attn_decoder_forward.1} parent=85 // pred_fallthru
          _
        // Predicated region
        $region119: #{attn_decoder_forward.1} parent=85 // pred_check
          %p1172 = pneg %p252
        $region120: #{attn_decoder_forward.1} parent=85 // pred_check_branch
          %1174 = sbr.rel (%p1172) target = $region122
        $region121: #{attn_decoder_forward.1} parent=85 // pred_region
          %1176 = dma.done [#allocation9], 16
        $region122: #{attn_decoder_forward.1} parent=85 // pred_fallthru
          _
      $region86: #{attn_decoder_forward.1} parent=5 // pred_fallthru
        _
      %p1177 = scmp.le.s32.totalorder 2, %s19
      // Predicated region
      $region123: #{attn_decoder_forward.1} parent=5 // pred_check
        %p1178 = pneg %p1177
      $region124: #{attn_decoder_forward.1} parent=5 // pred_check_branch
        %1180 = sbr.rel (%p1178) target = $region126
      $region125: #{attn_decoder_forward.1} parent=5 // pred_region
        %s1181 = ssub.s32 %s19, 2
      $region126: #{attn_decoder_forward.1} parent=5 // pred_fallthru
        _
    $region6: #{attn_decoder_forward.1} parent=1 // loop_footer
      %s23 = sadd.s32 1, %s19
    $region7: #{attn_decoder_forward.1} parent=1 // loop_footer_branch
      %18 = sbr.rel target = $region3
    $region8: #{attn_decoder_forward.1} parent=1 // loop_exit
      _
    %1182 = vsyncpa [#allocation7], 1
    %s1183 = scalar_lea.sflag [#allocation7], 1
    %1184 = vsyncpa %s1183, 1
    %1185 = vsyncpa [#allocation9], 1

</llo_original>
